<compile_context>
chip_gen: v7x
topology: tpu7x:2x2x1
jax: 0.10.0
libtpu: 0.0.40
codegen_flags: <defaults>
</compile_context>

<pallas_src>
import functools
import math

import jax
import jax.numpy as jnp
import numpy as np
from jax.experimental import pallas as pl
from jax.experimental.pallas import tpu as pltpu


# ----------------------------------------------------------------------------
# In-kernel helpers
# ----------------------------------------------------------------------------
def _group_norm_silu(x, gamma, beta, gmat, eps):
    """GroupNorm (stats over H*W and the channels of each group) + SiLU.

    x:    (HW, C) float32, one batch element, spatially flattened.
    gmat: (C, C) group-averaging matrix: 1/(gsz*HW) within a group, else 0.
    Two-pass variance (reuses gmat on (x - mu)^2) for numerical safety.
    """
    ch_sum = jnp.sum(x, axis=0, keepdims=True)                          # (1, C)
    mu = jnp.dot(ch_sum, gmat, preferred_element_type=jnp.float32)      # (1, C)
    d = x - mu
    sq_sum = jnp.sum(d * d, axis=0, keepdims=True)                      # (1, C)
    var = jnp.dot(sq_sum, gmat, preferred_element_type=jnp.float32)     # (1, C)
    y = d * jax.lax.rsqrt(var + eps) * gamma + beta
    return y * jax.nn.sigmoid(y)                                        # SiLU


def _conv3x3_same(y, w9, width):
    """Conv2d(3x3, padding='same') on a spatially flattened (HW, Cin) image.

    Builds a (HW, 9*Cin) patch matrix (tap order t = ky*3 + kx) and contracts
    it once against w9: (9*Cin, Cout).
      * dx = +/-1 shifts: +/-1 rows of the flattened image, masked at the
        left/right image borders (masks generated from iota, no DMA).
      * dy = +/-1 shifts: +/-`width` rows (sublane-aligned for W=8) of a
        zero-row-padded slab -> top/bottom borders become zeros.
    """
    HW, Cin = y.shape
    col = jax.lax.broadcasted_iota(jnp.int32, (HW, Cin), 0) % width
    m_l = (col >= 1).astype(y.dtype)              # valid when output col >= 1   (dx=-1)
    m_r = (col <= width - 2).astype(y.dtype)      # valid when output col <= W-2 (dx=+1)

    zc = jnp.zeros((8, Cin), y.dtype)
    yp = jnp.concatenate([zc, y, zc], axis=0)     # (HW + 16, Cin)
    y_l = yp[7:7 + HW, :] * m_l                   # y[j-1]  (dx = -1)
    y_r = yp[9:9 + HW, :] * m_r                   # y[j+1]  (dx = +1)

    row3 = jnp.concatenate([y_l, y, y_r], axis=-1)        # (HW, 3*Cin): dx=-1,0,+1
    z3 = jnp.zeros((width, 3 * Cin), y.dtype)
    p = jnp.concatenate([z3, row3, z3], axis=0)           # (HW + 2W, 3*Cin)
    patches = jnp.concatenate(                            # (HW, 9*Cin): t = ky*3+kx
        [p[0:HW, :], p[width:width + HW, :], p[2 * width:2 * width + HW, :]],
        axis=-1)
    return jnp.dot(patches, w9, preferred_element_type=jnp.float32)


# ----------------------------------------------------------------------------
# Fused ResBlock kernel (one batch element per grid step)
# ----------------------------------------------------------------------------
def resblock_kernel(x_ref, tc_ref, w_tc_ref, b_tc_ref, sc_w_ref, sc_b_ref,
                    gn1_g_ref, gn1_b_ref, gmat1_ref, conv1_w_ref, conv1_b_ref,
                    gn2_g_ref, gn2_b_ref, gmat2_ref, conv2_w_ref, conv2_b_ref,
                    o_ref, *, width, eps):
    x = x_ref[0]                                              # (HW, Cin)

    # Fused temb/cond Linear layers: single K=512 contraction -> (1, Chid).
    cbias = (jnp.dot(tc_ref[0], w_tc_ref[...],
                     preferred_element_type=jnp.float32) + b_tc_ref[...])

    # Shortcut: Conv2d(kernel_size=1) == per-pixel channel matmul.
    # TODO(synk): the nn.Identity shortcut branch (in_channels == out_channels)
    # is not implemented; this config has in_channels != out_channels.
    x0 = (jnp.dot(x, sc_w_ref[...], preferred_element_type=jnp.float32)
          + sc_b_ref[...])                                    # (HW, Cout)

    # out_nn_1: GN -> SiLU -> (Dropout p=0 is identity) -> Conv3x3,
    # with the temb+cond per-channel bias fused into the epilogue.
    y1 = _group_norm_silu(x, gn1_g_ref[...], gn1_b_ref[...], gmat1_ref[...], eps)
    h = _conv3x3_same(y1, conv1_w_ref[...], width) + conv1_b_ref[...] + cbias

    # out_nn_2: GN -> SiLU -> Conv3x3, then add the shortcut residual.
    y2 = _group_norm_silu(h, gn2_g_ref[...], gn2_b_ref[...], gmat2_ref[...], eps)
    out = _conv3x3_same(y2, conv2_w_ref[...], width) + conv2_b_ref[...] + x0

    o_ref[0] = out.astype(o_ref.dtype)


# ----------------------------------------------------------------------------
# Host-side wrapper
# ----------------------------------------------------------------------------
def make_group_mat(C, num_groups, HW):
    gsz = C // num_groups
    gid = jnp.arange(C) // gsz
    same = (gid[:, None] == gid[None, :]).astype(jnp.float32)
    return same / float(gsz * HW)


def res_block_forward(params, x_nchw, temb, cond, *, eps=1e-5):
    B, Cin, H, W = x_nchw.shape
    HW = H * W
    Chid = params["w_temb"].shape[-1]
    Cout = params["conv1_w"].shape[-1]
    assert Chid == Cout, "reference module only type-checks when hidden == out"

    # NCHW -> (B, H*W, C): channels land in the lane axis.
    x = jnp.transpose(x_nchw, (0, 2, 3, 1)).reshape(B, HW, Cin)

    # Host-side parameter packing (pure layout work).
    tc = jnp.concatenate([temb, cond], axis=-1).reshape(B, 1, -1)      # (B,1,512)
    TC = tc.shape[-1]
    w_tc = jnp.concatenate([params["w_temb"], params["w_cond"]], axis=0)
    b_tc = params["b_temb"] + params["b_cond"]
    conv1_w = params["conv1_w"].reshape(9 * Cin, Cout)     # rows: t*Cin + cin
    conv2_w = params["conv2_w"].reshape(9 * Chid, Cout)
    gmat1 = make_group_mat(Cin, Cin // 16, HW)
    gmat2 = make_group_mat(Chid, Chid // 16, HW)

    kernel = functools.partial(resblock_kernel, width=W, eps=eps)
    y = pl.pallas_call(
        kernel,
        out_shape=jax.ShapeDtypeStruct((B, HW, Cout), jnp.float32),
        grid=(B,),
        in_specs=[
            pl.BlockSpec((1, HW, Cin), lambda i: (i, 0, 0)),     # x
            pl.BlockSpec((1, 1, TC), lambda i: (i, 0, 0)),       # [temb|cond]
            pl.BlockSpec((TC, Chid), lambda i: (0, 0)),          # stacked dense W
            pl.BlockSpec((1, Chid), lambda i: (0, 0)),           # combined dense b
            pl.BlockSpec((Cin, Cout), lambda i: (0, 0)),         # shortcut 1x1 W
            pl.BlockSpec((1, Cout), lambda i: (0, 0)),           # shortcut b
            pl.BlockSpec((1, Cin), lambda i: (0, 0)),            # gn1 gamma
            pl.BlockSpec((1, Cin), lambda i: (0, 0)),            # gn1 beta
            pl.BlockSpec((Cin, Cin), lambda i: (0, 0)),          # gn1 group matrix
            pl.BlockSpec((9 * Cin, Cout), lambda i: (0, 0)),     # conv1 W (9Cin,Cout)
            pl.BlockSpec((1, Cout), lambda i: (0, 0)),           # conv1 b
            pl.BlockSpec((1, Chid), lambda i: (0, 0)),           # gn2 gamma
            pl.BlockSpec((1, Chid), lambda i: (0, 0)),           # gn2 beta
            pl.BlockSpec((Chid, Chid), lambda i: (0, 0)),        # gn2 group matrix
            pl.BlockSpec((9 * Chid, Cout), lambda i: (0, 0)),    # conv2 W
            pl.BlockSpec((1, Cout), lambda i: (0, 0)),           # conv2 b
        ],
        out_specs=pl.BlockSpec((1, HW, Cout), lambda i: (i, 0, 0)),
        compiler_params=pltpu.CompilerParams(
            dimension_semantics=("parallel",)),   # batch items independent -> 2 TCs on v7x
    )(x, tc, w_tc, b_tc, params["sc_w"], params["sc_b"],
      params["gn1_g"], params["gn1_b"], gmat1, conv1_w, params["conv1_b"],
      params["gn2_g"], params["gn2_b"], gmat2, conv2_w, params["conv2_b"])

    # (B, H*W, Cout) -> NCHW
    return jnp.transpose(y.reshape(B, H, W, Cout), (0, 3, 1, 2))


# ----------------------------------------------------------------------------
# Parameter init (matches the PyTorch module's layer shapes)
# ----------------------------------------------------------------------------
def _uniform(key, shape, bound):
    return jax.random.uniform(key, shape, jnp.float32, -bound, bound)


def init_params(key, in_ch, hid_ch, out_ch, temb_dim=256):
    ks = jax.random.split(key, 10)
    k_lin = 1.0 / math.sqrt(temb_dim)
    k_sc = 1.0 / math.sqrt(in_ch)
    k_c1 = 1.0 / math.sqrt(in_ch * 9)
    k_c2 = 1.0 / math.sqrt(hid_ch * 9)
    return dict(
        w_temb=_uniform(ks[0], (temb_dim, hid_ch), k_lin),
        b_temb=_uniform(ks[1], (1, hid_ch), k_lin),
        w_cond=_uniform(ks[2], (temb_dim, hid_ch), k_lin),
        b_cond=_uniform(ks[3], (1, hid_ch), k_lin),
        sc_w=_uniform(ks[4], (in_ch, out_ch), k_sc),        # 1x1 conv (Cin, Cout)
        sc_b=_uniform(ks[5], (1, out_ch), k_sc),
        gn1_g=jnp.ones((1, in_ch), jnp.float32),
        gn1_b=jnp.zeros((1, in_ch), jnp.float32),
        conv1_w=_uniform(ks[6], (9, in_ch, out_ch), k_c1),  # taps t=ky*3+kx, (Cin,Cout)
        conv1_b=_uniform(ks[7], (1, out_ch), k_c1),
        gn2_g=jnp.ones((1, hid_ch), jnp.float32),
        gn2_b=jnp.zeros((1, hid_ch), jnp.float32),
        conv2_w=_uniform(ks[8], (9, hid_ch, out_ch), k_c2),
        conv2_b=_uniform(ks[9], (1, out_ch), k_c2),
    )


# ----------------------------------------------------------------------------
# Pure-JAX reference of the PyTorch module (for a correctness check)
# ----------------------------------------------------------------------------
def _reference_forward(params, x, temb, cond, eps=1e-5):
    def group_norm(v, gamma, beta, groups):
        B, C, H, W = v.shape
        vg = v.reshape(B, groups, -1)
        mu = vg.mean(axis=-1, keepdims=True)
        var = vg.var(axis=-1, keepdims=True)
        vn = ((vg - mu) / jnp.sqrt(var + eps)).reshape(B, C, H, W)
        return vn * gamma.reshape(1, C, 1, 1) + beta.reshape(1, C, 1, 1)

    def conv3x3(v, w9, b):                       # w9: (9, Cin, Cout), t = ky*3+kx
        Ci, Co = w9.shape[1], w9.shape[2]
        w = w9.reshape(3, 3, Ci, Co).transpose(3, 2, 0, 1)   # OIHW
        y = jax.lax.conv_general_dilated(
            v, w, (1, 1), "SAME", dimension_numbers=("NCHW", "OIHW", "NCHW"))
        return y + b.reshape(1, Co, 1, 1)

    def conv1x1(v, w, b):                        # w: (Cin, Cout)
        y = jnp.einsum("bchw,co->bohw", v, w)
        return y + b.reshape(1, w.shape[1], 1, 1)

    def silu(v):
        return v * jax.nn.sigmoid(v)

    Cin = x.shape[1]
    Chid = params["w_temb"].shape[-1]
    x0 = conv1x1(x, params["sc_w"], params["sc_b"])
    h = conv3x3(silu(group_norm(x, params["gn1_g"], params["gn1_b"], Cin // 16)),
                params["conv1_w"], params["conv1_b"])
    tt = temb @ params["w_temb"] + params["b_temb"]
    cc = cond @ params["w_cond"] + params["b_cond"]
    h = h + (tt + cc)[:, :, None, None]
    y = conv3x3(silu(group_norm(h, params["gn2_g"], params["gn2_b"], Chid // 16)),
                params["conv2_w"], params["conv2_b"])
    return x0 + y


# ----------------------------------------------------------------------------
if __name__ == "__main__":
    B, Cin, Chid, Cout = 2, 16, 32, 32   # hidden must equal out (see note on top)
    H = W = 8

    key = jax.random.PRNGKey(0)
    k_x, k_t, k_c, k_p = jax.random.split(key, 4)
    x = jax.random.normal(k_x, (B, Cin, H, W), jnp.float32)   # NCHW like PyTorch
    temb = jax.random.normal(k_t, (B, 256), jnp.float32)
    cond = jax.random.normal(k_c, (B, 256), jnp.float32)

    params = init_params(k_p, Cin, Chid, Cout)

    out = res_block_forward(params, x, temb, cond)
    jax.block_until_ready(out)
    assert out.shape == (B, Cout, H, W)

    # Correctness check against a pure-JAX/XLA reference (loose tolerance to
    # absorb MXU default-precision differences; structural bugs are O(1)).
    ref = _reference_forward(params, x, temb, cond)
    np.testing.assert_allclose(np.asarray(out), np.asarray(ref),
                               rtol=5e-2, atol=5e-2)

    print("KERNEL_OK")
</pallas_src>

<mosaic_0001>
module attributes {stable_mosaic.version = 11 : i64} {
  func.func @resblock_kernel(%arg0: i32, %arg1: memref<1x64x16xf32, #tpu.memory_space<vmem>>, %arg2: memref<1x1x512xf32, #tpu.memory_space<vmem>>, %arg3: memref<512x32xf32, #tpu.memory_space<vmem>>, %arg4: memref<1x32xf32, #tpu.memory_space<vmem>>, %arg5: memref<16x32xf32, #tpu.memory_space<vmem>>, %arg6: memref<1x32xf32, #tpu.memory_space<vmem>>, %arg7: memref<1x16xf32, #tpu.memory_space<vmem>>, %arg8: memref<1x16xf32, #tpu.memory_space<vmem>>, %arg9: memref<16x16xf32, #tpu.memory_space<vmem>>, %arg10: memref<144x32xf32, #tpu.memory_space<vmem>>, %arg11: memref<1x32xf32, #tpu.memory_space<vmem>>, %arg12: memref<1x32xf32, #tpu.memory_space<vmem>>, %arg13: memref<1x32xf32, #tpu.memory_space<vmem>>, %arg14: memref<32x32xf32, #tpu.memory_space<vmem>>, %arg15: memref<288x32xf32, #tpu.memory_space<vmem>>, %arg16: memref<1x32xf32, #tpu.memory_space<vmem>>, %arg17: memref<1x64x32xf32, #tpu.memory_space<vmem>>) attributes {dimension_semantics = [#tpu.dimension_semantics<parallel>], iteration_bounds = array<i64: 2>, scalar_prefetch = 0 : i64, scratch_operands = 0 : i64, tpu.core_type = #tpu.core_type<tc>, window_params = [{transform_indices = @transform_0, window_bounds = array<i64: 1, 64, 16>}, {transform_indices = @transform_1, window_bounds = array<i64: 1, 1, 512>}, {pipeline_mode = #tpu.pipeline_mode<synchronous>, transform_indices = @transform_2, window_bounds = array<i64: 512, 32>}, {pipeline_mode = #tpu.pipeline_mode<synchronous>, transform_indices = @transform_3, window_bounds = array<i64: 1, 32>}, {pipeline_mode = #tpu.pipeline_mode<synchronous>, transform_indices = @transform_4, window_bounds = array<i64: 16, 32>}, {pipeline_mode = #tpu.pipeline_mode<synchronous>, transform_indices = @transform_5, window_bounds = array<i64: 1, 32>}, {pipeline_mode = #tpu.pipeline_mode<synchronous>, transform_indices = @transform_6, window_bounds = array<i64: 1, 16>}, {pipeline_mode = #tpu.pipeline_mode<synchronous>, transform_indices = @transform_7, window_bounds = array<i64: 1, 16>}, {pipeline_mode = #tpu.pipeline_mode<synchronous>, transform_indices = @transform_8, window_bounds = array<i64: 16, 16>}, {pipeline_mode = #tpu.pipeline_mode<synchronous>, transform_indices = @transform_9, window_bounds = array<i64: 144, 32>}, {pipeline_mode = #tpu.pipeline_mode<synchronous>, transform_indices = @transform_10, window_bounds = array<i64: 1, 32>}, {pipeline_mode = #tpu.pipeline_mode<synchronous>, transform_indices = @transform_11, window_bounds = array<i64: 1, 32>}, {pipeline_mode = #tpu.pipeline_mode<synchronous>, transform_indices = @transform_12, window_bounds = array<i64: 1, 32>}, {pipeline_mode = #tpu.pipeline_mode<synchronous>, transform_indices = @transform_13, window_bounds = array<i64: 32, 32>}, {pipeline_mode = #tpu.pipeline_mode<synchronous>, transform_indices = @transform_14, window_bounds = array<i64: 288, 32>}, {pipeline_mode = #tpu.pipeline_mode<synchronous>, transform_indices = @transform_15, window_bounds = array<i64: 1, 32>}, {transform_indices = @transform_16, window_bounds = array<i64: 1, 64, 32>}]} {
    %c0 = arith.constant 0 : index
    %c0_0 = arith.constant 0 : index
    %c0_1 = arith.constant 0 : index
    %0 = vector.load %arg1[%c0, %c0_0, %c0_1] : memref<1x64x16xf32, #tpu.memory_space<vmem>>, vector<1x64x16xf32>
    %1 = vector.shape_cast %0 : vector<1x64x16xf32> to vector<64x16xf32>
    %c0_2 = arith.constant 0 : index
    %c0_3 = arith.constant 0 : index
    %c0_4 = arith.constant 0 : index
    %2 = vector.load %arg2[%c0_2, %c0_3, %c0_4] : memref<1x1x512xf32, #tpu.memory_space<vmem>>, vector<1x1x512xf32>
    %3 = vector.shape_cast %2 : vector<1x1x512xf32> to vector<1x512xf32>
    %c0_5 = arith.constant 0 : index
    %c0_6 = arith.constant 0 : index
    %4 = vector.load %arg3[%c0_5, %c0_6] : memref<512x32xf32, #tpu.memory_space<vmem>>, vector<512x32xf32>
    %cst = arith.constant dense<0.000000e+00> : vector<1x32xf32>
    %5 = tpu.matmul %3, %4, %cst {dimension_numbers = #tpu.dot_dimension_numbers<[1], [0], [0], [1], [0, 0, 1, 1], [], []>} : vector<1x512xf32>, vector<512x32xf32>, vector<1x32xf32> -> vector<1x32xf32>
    %c0_7 = arith.constant 0 : index
    %c0_8 = arith.constant 0 : index
    %6 = vector.load %arg4[%c0_7, %c0_8] : memref<1x32xf32, #tpu.memory_space<vmem>>, vector<1x32xf32>
    %7 = arith.addf %5, %6 : vector<1x32xf32>
    %c0_9 = arith.constant 0 : index
    %c0_10 = arith.constant 0 : index
    %8 = vector.load %arg5[%c0_9, %c0_10] : memref<16x32xf32, #tpu.memory_space<vmem>>, vector<16x32xf32>
    %cst_11 = arith.constant dense<0.000000e+00> : vector<64x32xf32>
    %9 = tpu.matmul %1, %8, %cst_11 {dimension_numbers = #tpu.dot_dimension_numbers<[1], [0], [0], [1], [0, 0, 1, 1], [], []>} : vector<64x16xf32>, vector<16x32xf32>, vector<64x32xf32> -> vector<64x32xf32>
    %c0_12 = arith.constant 0 : index
    %c0_13 = arith.constant 0 : index
    %10 = vector.load %arg6[%c0_12, %c0_13] : memref<1x32xf32, #tpu.memory_space<vmem>>, vector<1x32xf32>
    %11 = vector.broadcast %10 : vector<1x32xf32> to vector<64x32xf32>
    %12 = arith.addf %9, %11 : vector<64x32xf32>
    %c0_14 = arith.constant 0 : index
    %c0_15 = arith.constant 0 : index
    %13 = vector.load %arg7[%c0_14, %c0_15] : memref<1x16xf32, #tpu.memory_space<vmem>>, vector<1x16xf32>
    %c0_16 = arith.constant 0 : index
    %c0_17 = arith.constant 0 : index
    %14 = vector.load %arg8[%c0_16, %c0_17] : memref<1x16xf32, #tpu.memory_space<vmem>>, vector<1x16xf32>
    %c0_18 = arith.constant 0 : index
    %c0_19 = arith.constant 0 : index
    %15 = vector.load %arg9[%c0_18, %c0_19] : memref<16x16xf32, #tpu.memory_space<vmem>>, vector<16x16xf32>
    %cst_20 = arith.constant dense<0.000000e+00> : vector<16xf32>
    %16 = vector.multi_reduction <add>, %1, %cst_20 [0] : vector<64x16xf32> to vector<16xf32>
    %17 = vector.shape_cast %16 : vector<16xf32> to vector<1x16xf32>
    %cst_21 = arith.constant dense<0.000000e+00> : vector<1x16xf32>
    %18 = tpu.matmul %17, %15, %cst_21 {dimension_numbers = #tpu.dot_dimension_numbers<[1], [0], [0], [1], [0, 0, 1, 1], [], []>} : vector<1x16xf32>, vector<16x16xf32>, vector<1x16xf32> -> vector<1x16xf32>
    %19 = vector.broadcast %18 : vector<1x16xf32> to vector<64x16xf32>
    %20 = arith.subf %1, %19 : vector<64x16xf32>
    %21 = arith.mulf %20, %20 : vector<64x16xf32>
    %cst_22 = arith.constant dense<0.000000e+00> : vector<16xf32>
    %22 = vector.multi_reduction <add>, %21, %cst_22 [0] : vector<64x16xf32> to vector<16xf32>
    %23 = vector.shape_cast %22 : vector<16xf32> to vector<1x16xf32>
    %cst_23 = arith.constant dense<0.000000e+00> : vector<1x16xf32>
    %24 = tpu.matmul %23, %15, %cst_23 {dimension_numbers = #tpu.dot_dimension_numbers<[1], [0], [0], [1], [0, 0, 1, 1], [], []>} : vector<1x16xf32>, vector<16x16xf32>, vector<1x16xf32> -> vector<1x16xf32>
    %cst_24 = arith.constant 9.99999974E-6 : f32
    %25 = vector.broadcast %cst_24 : f32 to vector<1x16xf32>
    %26 = arith.addf %24, %25 : vector<1x16xf32>
    %27 = math.rsqrt %26 : vector<1x16xf32>
    %28 = vector.broadcast %27 : vector<1x16xf32> to vector<64x16xf32>
    %29 = arith.mulf %20, %28 : vector<64x16xf32>
    %30 = vector.broadcast %13 : vector<1x16xf32> to vector<64x16xf32>
    %31 = arith.mulf %29, %30 : vector<64x16xf32>
    %32 = vector.broadcast %14 : vector<1x16xf32> to vector<64x16xf32>
    %33 = arith.addf %31, %32 : vector<64x16xf32>
    %34 = arith.negf %33 : vector<64x16xf32>
    %35 = math.exp %34 : vector<64x16xf32>
    %cst_25 = arith.constant 1.000000e+00 : f32
    %36 = vector.broadcast %cst_25 : f32 to vector<64x16xf32>
    %37 = arith.addf %36, %35 : vector<64x16xf32>
    %38 = arith.divf %36, %37 : vector<64x16xf32>
    %39 = arith.mulf %33, %38 : vector<64x16xf32>
    %c0_26 = arith.constant 0 : index
    %c0_27 = arith.constant 0 : index
    %40 = vector.load %arg10[%c0_26, %c0_27] : memref<144x32xf32, #tpu.memory_space<vmem>>, vector<144x32xf32>
    %41 = tpu.iota {dimensions = array<i32: 0>} : vector<64x16xi32>
    %c8_i32 = arith.constant 8 : i32
    %c0_i32 = arith.constant 0 : i32
    %42 = arith.cmpi eq, %c8_i32, %c0_i32 : i32
    %c1_i32 = arith.constant 1 : i32
    %43 = arith.select %42, %c1_i32, %c8_i32 : i32
    %44 = vector.broadcast %43 : i32 to vector<64x16xi32>
    %45 = arith.remsi %41, %44 : vector<64x16xi32>
    %c0_i32_28 = arith.constant 0 : i32
    %46 = vector.broadcast %c0_i32_28 : i32 to vector<64x16xi32>
    %47 = arith.cmpi ne, %45, %46 : vector<64x16xi32>
    %c0_i32_29 = arith.constant 0 : i32
    %48 = vector.broadcast %c0_i32_29 : i32 to vector<64x16xi32>
    %49 = arith.cmpi slt, %45, %48 : vector<64x16xi32>
    %c0_i32_30 = arith.constant 0 : i32
    %50 = arith.cmpi slt, %43, %c0_i32_30 : i32
    %51 = vector.broadcast %50 : i1 to vector<64x16xi1>
    %52 = vector.broadcast %51 : vector<64x16xi1> to vector<64x16xi1>
    %53 = arith.xori %49, %52 : vector<64x16xi1>
    %54 = arith.andi %53, %47 : vector<64x16xi1>
    %55 = vector.broadcast %43 : i32 to vector<64x16xi32>
    %56 = arith.addi %45, %55 : vector<64x16xi32>
    %57 = arith.select %54, %56, %45 : vector<64x16xi1>, vector<64x16xi32>
    %c1_i32_31 = arith.constant 1 : i32
    %58 = vector.broadcast %c1_i32_31 : i32 to vector<64x16xi32>
    %59 = arith.cmpi sge, %57, %58 : vector<64x16xi32>
    %60 = arith.extui %59 : vector<64x16xi1> to vector<64x16xi32>
    %61 = arith.sitofp %60 : vector<64x16xi32> to vector<64x16xf32>
    %c6_i32 = arith.constant 6 : i32
    %62 = vector.broadcast %c6_i32 : i32 to vector<64x16xi32>
    %63 = arith.cmpi sle, %57, %62 : vector<64x16xi32>
    %64 = arith.extui %63 : vector<64x16xi1> to vector<64x16xi32>
    %65 = arith.sitofp %64 : vector<64x16xi32> to vector<64x16xf32>
    %cst_32 = arith.constant 0.000000e+00 : f32
    %66 = vector.broadcast %cst_32 : f32 to vector<8x16xf32>
    %67 = tpu.concatenate %66, %39, %66 in 0 : vector<8x16xf32>, vector<64x16xf32>, vector<8x16xf32> -> vector<80x16xf32>
    %68 = vector.extract_strided_slice %67 {offsets = [7, 0], sizes = [64, 16], strides = [1, 1]} : vector<80x16xf32> to vector<64x16xf32>
    %69 = arith.mulf %68, %61 : vector<64x16xf32>
    %70 = vector.extract_strided_slice %67 {offsets = [9, 0], sizes = [64, 16], strides = [1, 1]} : vector<80x16xf32> to vector<64x16xf32>
    %71 = arith.mulf %70, %65 : vector<64x16xf32>
    %72 = tpu.concatenate %69, %39, %71 in 1 : vector<64x16xf32>, vector<64x16xf32>, vector<64x16xf32> -> vector<64x48xf32>
    %cst_33 = arith.constant 0.000000e+00 : f32
    %73 = vector.broadcast %cst_33 : f32 to vector<8x48xf32>
    %74 = tpu.concatenate %73, %72, %73 in 0 : vector<8x48xf32>, vector<64x48xf32>, vector<8x48xf32> -> vector<80x48xf32>
    %75 = vector.extract_strided_slice %74 {offsets = [0, 0], sizes = [64, 48], strides = [1, 1]} : vector<80x48xf32> to vector<64x48xf32>
    %76 = vector.extract_strided_slice %74 {offsets = [8, 0], sizes = [64, 48], strides = [1, 1]} : vector<80x48xf32> to vector<64x48xf32>
    %77 = vector.extract_strided_slice %74 {offsets = [16, 0], sizes = [64, 48], strides = [1, 1]} : vector<80x48xf32> to vector<64x48xf32>
    %78 = tpu.concatenate %75, %76, %77 in 1 : vector<64x48xf32>, vector<64x48xf32>, vector<64x48xf32> -> vector<64x144xf32>
    %cst_34 = arith.constant dense<0.000000e+00> : vector<64x32xf32>
    %79 = tpu.matmul %78, %40, %cst_34 {dimension_numbers = #tpu.dot_dimension_numbers<[1], [0], [0], [1], [0, 0, 1, 1], [], []>} : vector<64x144xf32>, vector<144x32xf32>, vector<64x32xf32> -> vector<64x32xf32>
    %c0_35 = arith.constant 0 : index
    %c0_36 = arith.constant 0 : index
    %80 = vector.load %arg11[%c0_35, %c0_36] : memref<1x32xf32, #tpu.memory_space<vmem>>, vector<1x32xf32>
    %81 = vector.broadcast %80 : vector<1x32xf32> to vector<64x32xf32>
    %82 = arith.addf %79, %81 : vector<64x32xf32>
    %83 = vector.broadcast %7 : vector<1x32xf32> to vector<64x32xf32>
    %84 = arith.addf %82, %83 : vector<64x32xf32>
    %c0_37 = arith.constant 0 : index
    %c0_38 = arith.constant 0 : index
    %85 = vector.load %arg12[%c0_37, %c0_38] : memref<1x32xf32, #tpu.memory_space<vmem>>, vector<1x32xf32>
    %c0_39 = arith.constant 0 : index
    %c0_40 = arith.constant 0 : index
    %86 = vector.load %arg13[%c0_39, %c0_40] : memref<1x32xf32, #tpu.memory_space<vmem>>, vector<1x32xf32>
    %c0_41 = arith.constant 0 : index
    %c0_42 = arith.constant 0 : index
    %87 = vector.load %arg14[%c0_41, %c0_42] : memref<32x32xf32, #tpu.memory_space<vmem>>, vector<32x32xf32>
    %cst_43 = arith.constant dense<0.000000e+00> : vector<32xf32>
    %88 = vector.multi_reduction <add>, %84, %cst_43 [0] : vector<64x32xf32> to vector<32xf32>
    %89 = vector.shape_cast %88 : vector<32xf32> to vector<1x32xf32>
    %cst_44 = arith.constant dense<0.000000e+00> : vector<1x32xf32>
    %90 = tpu.matmul %89, %87, %cst_44 {dimension_numbers = #tpu.dot_dimension_numbers<[1], [0], [0], [1], [0, 0, 1, 1], [], []>} : vector<1x32xf32>, vector<32x32xf32>, vector<1x32xf32> -> vector<1x32xf32>
    %91 = vector.broadcast %90 : vector<1x32xf32> to vector<64x32xf32>
    %92 = arith.subf %84, %91 : vector<64x32xf32>
    %93 = arith.mulf %92, %92 : vector<64x32xf32>
    %cst_45 = arith.constant dense<0.000000e+00> : vector<32xf32>
    %94 = vector.multi_reduction <add>, %93, %cst_45 [0] : vector<64x32xf32> to vector<32xf32>
    %95 = vector.shape_cast %94 : vector<32xf32> to vector<1x32xf32>
    %cst_46 = arith.constant dense<0.000000e+00> : vector<1x32xf32>
    %96 = tpu.matmul %95, %87, %cst_46 {dimension_numbers = #tpu.dot_dimension_numbers<[1], [0], [0], [1], [0, 0, 1, 1], [], []>} : vector<1x32xf32>, vector<32x32xf32>, vector<1x32xf32> -> vector<1x32xf32>
    %cst_47 = arith.constant 9.99999974E-6 : f32
    %97 = vector.broadcast %cst_47 : f32 to vector<1x32xf32>
    %98 = arith.addf %96, %97 : vector<1x32xf32>
    %99 = math.rsqrt %98 : vector<1x32xf32>
    %100 = vector.broadcast %99 : vector<1x32xf32> to vector<64x32xf32>
    %101 = arith.mulf %92, %100 : vector<64x32xf32>
    %102 = vector.broadcast %85 : vector<1x32xf32> to vector<64x32xf32>
    %103 = arith.mulf %101, %102 : vector<64x32xf32>
    %104 = vector.broadcast %86 : vector<1x32xf32> to vector<64x32xf32>
    %105 = arith.addf %103, %104 : vector<64x32xf32>
    %106 = arith.negf %105 : vector<64x32xf32>
    %107 = math.exp %106 : vector<64x32xf32>
    %cst_48 = arith.constant 1.000000e+00 : f32
    %108 = vector.broadcast %cst_48 : f32 to vector<64x32xf32>
    %109 = arith.addf %108, %107 : vector<64x32xf32>
    %110 = arith.divf %108, %109 : vector<64x32xf32>
    %111 = arith.mulf %105, %110 : vector<64x32xf32>
    %c0_49 = arith.constant 0 : index
    %c0_50 = arith.constant 0 : index
    %112 = vector.load %arg15[%c0_49, %c0_50] : memref<288x32xf32, #tpu.memory_space<vmem>>, vector<288x32xf32>
    %113 = tpu.iota {dimensions = array<i32: 0>} : vector<64x32xi32>
    %c8_i32_51 = arith.constant 8 : i32
    %c0_i32_52 = arith.constant 0 : i32
    %114 = arith.cmpi eq, %c8_i32_51, %c0_i32_52 : i32
    %c1_i32_53 = arith.constant 1 : i32
    %115 = arith.select %114, %c1_i32_53, %c8_i32_51 : i32
    %116 = vector.broadcast %115 : i32 to vector<64x32xi32>
    %117 = arith.remsi %113, %116 : vector<64x32xi32>
    %c0_i32_54 = arith.constant 0 : i32
    %118 = vector.broadcast %c0_i32_54 : i32 to vector<64x32xi32>
    %119 = arith.cmpi ne, %117, %118 : vector<64x32xi32>
    %c0_i32_55 = arith.constant 0 : i32
    %120 = vector.broadcast %c0_i32_55 : i32 to vector<64x32xi32>
    %121 = arith.cmpi slt, %117, %120 : vector<64x32xi32>
    %c0_i32_56 = arith.constant 0 : i32
    %122 = arith.cmpi slt, %115, %c0_i32_56 : i32
    %123 = vector.broadcast %122 : i1 to vector<64x32xi1>
    %124 = vector.broadcast %123 : vector<64x32xi1> to vector<64x32xi1>
    %125 = arith.xori %121, %124 : vector<64x32xi1>
    %126 = arith.andi %125, %119 : vector<64x32xi1>
    %127 = vector.broadcast %115 : i32 to vector<64x32xi32>
    %128 = arith.addi %117, %127 : vector<64x32xi32>
    %129 = arith.select %126, %128, %117 : vector<64x32xi1>, vector<64x32xi32>
    %c1_i32_57 = arith.constant 1 : i32
    %130 = vector.broadcast %c1_i32_57 : i32 to vector<64x32xi32>
    %131 = arith.cmpi sge, %129, %130 : vector<64x32xi32>
    %132 = arith.extui %131 : vector<64x32xi1> to vector<64x32xi32>
    %133 = arith.sitofp %132 : vector<64x32xi32> to vector<64x32xf32>
    %c6_i32_58 = arith.constant 6 : i32
    %134 = vector.broadcast %c6_i32_58 : i32 to vector<64x32xi32>
    %135 = arith.cmpi sle, %129, %134 : vector<64x32xi32>
    %136 = arith.extui %135 : vector<64x32xi1> to vector<64x32xi32>
    %137 = arith.sitofp %136 : vector<64x32xi32> to vector<64x32xf32>
    %cst_59 = arith.constant 0.000000e+00 : f32
    %138 = vector.broadcast %cst_59 : f32 to vector<8x32xf32>
    %139 = tpu.concatenate %138, %111, %138 in 0 : vector<8x32xf32>, vector<64x32xf32>, vector<8x32xf32> -> vector<80x32xf32>
    %140 = vector.extract_strided_slice %139 {offsets = [7, 0], sizes = [64, 32], strides = [1, 1]} : vector<80x32xf32> to vector<64x32xf32>
    %141 = arith.mulf %140, %133 : vector<64x32xf32>
    %142 = vector.extract_strided_slice %139 {offsets = [9, 0], sizes = [64, 32], strides = [1, 1]} : vector<80x32xf32> to vector<64x32xf32>
    %143 = arith.mulf %142, %137 : vector<64x32xf32>
    %144 = tpu.concatenate %141, %111, %143 in 1 : vector<64x32xf32>, vector<64x32xf32>, vector<64x32xf32> -> vector<64x96xf32>
    %cst_60 = arith.constant 0.000000e+00 : f32
    %145 = vector.broadcast %cst_60 : f32 to vector<8x96xf32>
    %146 = tpu.concatenate %145, %144, %145 in 0 : vector<8x96xf32>, vector<64x96xf32>, vector<8x96xf32> -> vector<80x96xf32>
    %147 = vector.extract_strided_slice %146 {offsets = [0, 0], sizes = [64, 96], strides = [1, 1]} : vector<80x96xf32> to vector<64x96xf32>
    %148 = vector.extract_strided_slice %146 {offsets = [8, 0], sizes = [64, 96], strides = [1, 1]} : vector<80x96xf32> to vector<64x96xf32>
    %149 = vector.extract_strided_slice %146 {offsets = [16, 0], sizes = [64, 96], strides = [1, 1]} : vector<80x96xf32> to vector<64x96xf32>
    %150 = tpu.concatenate %147, %148, %149 in 1 : vector<64x96xf32>, vector<64x96xf32>, vector<64x96xf32> -> vector<64x288xf32>
    %cst_61 = arith.constant dense<0.000000e+00> : vector<64x32xf32>
    %151 = tpu.matmul %150, %112, %cst_61 {dimension_numbers = #tpu.dot_dimension_numbers<[1], [0], [0], [1], [0, 0, 1, 1], [], []>} : vector<64x288xf32>, vector<288x32xf32>, vector<64x32xf32> -> vector<64x32xf32>
    %c0_62 = arith.constant 0 : index
    %c0_63 = arith.constant 0 : index
    %152 = vector.load %arg16[%c0_62, %c0_63] : memref<1x32xf32, #tpu.memory_space<vmem>>, vector<1x32xf32>
    %153 = vector.broadcast %152 : vector<1x32xf32> to vector<64x32xf32>
    %154 = arith.addf %151, %153 : vector<64x32xf32>
    %155 = arith.addf %154, %12 : vector<64x32xf32>
    %c0_64 = arith.constant 0 : index
    %c0_65 = arith.constant 0 : index
    %c0_66 = arith.constant 0 : index
    %156 = vector.load %arg17[%c0_64, %c0_65, %c0_66] : memref<1x64x32xf32, #tpu.memory_space<vmem>>, vector<1x64x32xf32>
    %157 = vector.shape_cast %156 : vector<1x64x32xf32> to vector<64x32xf32>
    %158 = vector.shape_cast %155 : vector<64x32xf32> to vector<1x64x32xf32>
    tpu.vector_store %arg17[%c0_64, %c0_65, %c0_66], %158 {strides = array<i32>} : memref<1x64x32xf32, #tpu.memory_space<vmem>>, vector<1x64x32xf32>,
    return
  }
  func.func @transform_0(%arg0: i32) -> (i32, i32, i32) {
    %c0_i32 = arith.constant 0 : i32
    %c0_i32_0 = arith.constant 0 : i32
    %c0_i32_1 = arith.constant 0 : i32
    return %arg0, %c0_i32, %c0_i32_0 : i32, i32, i32
  }
  func.func @transform_1(%arg0: i32) -> (i32, i32, i32) {
    %c0_i32 = arith.constant 0 : i32
    %c0_i32_0 = arith.constant 0 : i32
    %c0_i32_1 = arith.constant 0 : i32
    return %arg0, %c0_i32, %c0_i32_0 : i32, i32, i32
  }
  func.func @transform_2(%arg0: i32) -> (i32, i32) {
    %c0_i32 = arith.constant 0 : i32
    %c0_i32_0 = arith.constant 0 : i32
    %c0_i32_1 = arith.constant 0 : i32
    return %c0_i32, %c0_i32_0 : i32, i32
  }
  func.func @transform_3(%arg0: i32) -> (i32, i32) {
    %c0_i32 = arith.constant 0 : i32
    %c0_i32_0 = arith.constant 0 : i32
    %c0_i32_1 = arith.constant 0 : i32
    return %c0_i32, %c0_i32_0 : i32, i32
  }
  func.func @transform_4(%arg0: i32) -> (i32, i32) {
    %c0_i32 = arith.constant 0 : i32
    %c0_i32_0 = arith.constant 0 : i32
    %c0_i32_1 = arith.constant 0 : i32
    return %c0_i32, %c0_i32_0 : i32, i32
  }
  func.func @transform_5(%arg0: i32) -> (i32, i32) {
    %c0_i32 = arith.constant 0 : i32
    %c0_i32_0 = arith.constant 0 : i32
    %c0_i32_1 = arith.constant 0 : i32
    return %c0_i32, %c0_i32_0 : i32, i32
  }
  func.func @transform_6(%arg0: i32) -> (i32, i32) {
    %c0_i32 = arith.constant 0 : i32
    %c0_i32_0 = arith.constant 0 : i32
    %c0_i32_1 = arith.constant 0 : i32
    return %c0_i32, %c0_i32_0 : i32, i32
  }
  func.func @transform_7(%arg0: i32) -> (i32, i32) {
    %c0_i32 = arith.constant 0 : i32
    %c0_i32_0 = arith.constant 0 : i32
    %c0_i32_1 = arith.constant 0 : i32
    return %c0_i32, %c0_i32_0 : i32, i32
  }
  func.func @transform_8(%arg0: i32) -> (i32, i32) {
    %c0_i32 = arith.constant 0 : i32
    %c0_i32_0 = arith.constant 0 : i32
    %c0_i32_1 = arith.constant 0 : i32
    return %c0_i32, %c0_i32_0 : i32, i32
  }
  func.func @transform_9(%arg0: i32) -> (i32, i32) {
    %c0_i32 = arith.constant 0 : i32
    %c0_i32_0 = arith.constant 0 : i32
    %c0_i32_1 = arith.constant 0 : i32
    return %c0_i32, %c0_i32_0 : i32, i32
  }
  func.func @transform_10(%arg0: i32) -> (i32, i32) {
    %c0_i32 = arith.constant 0 : i32
    %c0_i32_0 = arith.constant 0 : i32
    %c0_i32_1 = arith.constant 0 : i32
    return %c0_i32, %c0_i32_0 : i32, i32
  }
  func.func @transform_11(%arg0: i32) -> (i32, i32) {
    %c0_i32 = arith.constant 0 : i32
    %c0_i32_0 = arith.constant 0 : i32
    %c0_i32_1 = arith.constant 0 : i32
    return %c0_i32, %c0_i32_0 : i32, i32
  }
  func.func @transform_12(%arg0: i32) -> (i32, i32) {
    %c0_i32 = arith.constant 0 : i32
    %c0_i32_0 = arith.constant 0 : i32
    %c0_i32_1 = arith.constant 0 : i32
    return %c0_i32, %c0_i32_0 : i32, i32
  }
  func.func @transform_13(%arg0: i32) -> (i32, i32) {
    %c0_i32 = arith.constant 0 : i32
    %c0_i32_0 = arith.constant 0 : i32
    %c0_i32_1 = arith.constant 0 : i32
    return %c0_i32, %c0_i32_0 : i32, i32
  }
  func.func @transform_14(%arg0: i32) -> (i32, i32) {
    %c0_i32 = arith.constant 0 : i32
    %c0_i32_0 = arith.constant 0 : i32
    %c0_i32_1 = arith.constant 0 : i32
    return %c0_i32, %c0_i32_0 : i32, i32
  }
  func.func @transform_15(%arg0: i32) -> (i32, i32) {
    %c0_i32 = arith.constant 0 : i32
    %c0_i32_0 = arith.constant 0 : i32
    %c0_i32_1 = arith.constant 0 : i32
    return %c0_i32, %c0_i32_0 : i32, i32
  }
  func.func @transform_16(%arg0: i32) -> (i32, i32, i32) {
    %c0_i32 = arith.constant 0 : i32
    %c0_i32_0 = arith.constant 0 : i32
    %c0_i32_1 = arith.constant 0 : i32
    return %arg0, %c0_i32, %c0_i32_0 : i32, i32, i32
  }
}

</mosaic_0001>

<llo_original>
// kernel: tpu_custom_call.1
$region0: #{tpu_custom_call.1}
  #allocation0 [shape = 'u32[]', space=smem, size = 0x4, offset = 0x4, fixed_abs, tag = 'smem constant byte address 0x4 - core index']
  #allocation1 [shape = 'u32[144,128]{1,0:T(1,128)}', space=vmem, size = 0x12000, scoped, tag = 'internal scratch']
  %s0 = inlined_call_operand.vmem [shape: f32[2,64,16], index: 0, kind: input, shape index: {}]
  %s1 = inlined_call_operand.vmem [shape: f32[2,1,512], index: 1, kind: input, shape index: {}]
  %s2 = inlined_call_operand.vmem [shape: f32[512,32], index: 2, kind: input, shape index: {}]
  %s3 = inlined_call_operand.vmem [shape: f32[1,32], index: 3, kind: input, shape index: {}]
  %s4 = inlined_call_operand.vmem [shape: f32[16,32], index: 4, kind: input, shape index: {}]
  %s5 = inlined_call_operand.vmem [shape: f32[1,32], index: 5, kind: input, shape index: {}]
  %s6 = inlined_call_operand.vmem [shape: f32[1,16], index: 6, kind: input, shape index: {}]
  %s7 = inlined_call_operand.vmem [shape: f32[1,16], index: 7, kind: input, shape index: {}]
  %s8 = inlined_call_operand.vmem [shape: f32[16,16], index: 8, kind: input, shape index: {}]
  %s9 = inlined_call_operand.vmem [shape: f32[144,32], index: 9, kind: input, shape index: {}]
  %s10 = inlined_call_operand.vmem [shape: f32[1,32], index: 10, kind: input, shape index: {}]
  %s11 = inlined_call_operand.vmem [shape: f32[1,32], index: 11, kind: input, shape index: {}]
  %s12 = inlined_call_operand.vmem [shape: f32[1,32], index: 12, kind: input, shape index: {}]
  %s13 = inlined_call_operand.vmem [shape: f32[32,32], index: 13, kind: input, shape index: {}]
  %s14 = inlined_call_operand.vmem [shape: f32[288,32], index: 14, kind: input, shape index: {}]
  %s15 = inlined_call_operand.vmem [shape: f32[1,32], index: 15, kind: input, shape index: {}]
  %s16 = inlined_call_operand.vmem [shape: f32[2,64,32], index: 16, kind: output, shape index: {}]
  %s17 = sld [smem:[#allocation0]]
  $region97: #{tpu_custom_call.1} parent=0
    _
  %s19 = ssub.s32 1, %s17
  %s20 = scalar_select 0, %s19, %s17
  loop: start=0, step=1, limit=4
  $region2: #{tpu_custom_call.1} parent=0 // loop_pre_header
    _
  $region3: #{tpu_custom_call.1} parent=0 // loop_header
    %s22 = sphi 0, %s26
    %p23 = scmp.ge.s32.totalorder %s22, 4
    %s32 = sphi 0, %s34
    %s35 = sphi 0, %s32
    %s36 = sphi 0, %s35
    %s52 = sphi 0, %s36
    %s58 = sphi 0, %s60
    %s61 = sphi 0, %s58
    %s62 = sphi 0, %s61
    %s78 = sphi 0, %s62
    %s82 = sphi 0, %s82
    %s84 = sphi 0, %s82
    %s85 = sphi 0, %s84
    %s99 = sphi 0, %s85
    %s103 = sphi 0, %s103
    %s105 = sphi 0, %s103
    %s106 = sphi 0, %s105
    %s120 = sphi 0, %s106
    %s124 = sphi 0, %s124
    %s126 = sphi 0, %s124
    %s127 = sphi 0, %s126
    %s141 = sphi 0, %s127
    %s145 = sphi 0, %s145
    %s147 = sphi 0, %s145
    %s148 = sphi 0, %s147
    %s162 = sphi 0, %s148
    %s166 = sphi 0, %s166
    %s168 = sphi 0, %s166
    %s169 = sphi 0, %s168
    %s183 = sphi 0, %s169
    %s187 = sphi 0, %s187
    %s189 = sphi 0, %s187
    %s190 = sphi 0, %s189
    %s204 = sphi 0, %s190
    %s208 = sphi 0, %s208
    %s210 = sphi 0, %s208
    %s211 = sphi 0, %s210
    %s225 = sphi 0, %s211
    %s229 = sphi 0, %s229
    %s231 = sphi 0, %s229
    %s232 = sphi 0, %s231
    %s246 = sphi 0, %s232
    %s250 = sphi 0, %s250
    %s252 = sphi 0, %s250
    %s253 = sphi 0, %s252
    %s267 = sphi 0, %s253
    %s271 = sphi 0, %s271
    %s273 = sphi 0, %s271
    %s274 = sphi 0, %s273
    %s288 = sphi 0, %s274
    %s292 = sphi 0, %s292
    %s294 = sphi 0, %s292
    %s295 = sphi 0, %s294
    %s309 = sphi 0, %s295
    %s313 = sphi 0, %s313
    %s315 = sphi 0, %s313
    %s316 = sphi 0, %s315
    %s330 = sphi 0, %s316
    %s334 = sphi 0, %s334
    %s336 = sphi 0, %s334
    %s337 = sphi 0, %s336
    %s351 = sphi 0, %s337
    %s355 = sphi 0, %s355
    %s357 = sphi 0, %s355
    %s358 = sphi 0, %s357
    %s372 = sphi 0, %s358
    %s378 = sphi 0, %s380
    %s381 = sphi 0, %s378
    %s382 = sphi 0, %s381
    %s398 = sphi 0, %s382
  $region4: #{tpu_custom_call.1} parent=0 // loop_header_branch
    %25 = sbr.rel (%p23) target = $region8
  $region5: #{tpu_custom_call.1} parent=0 // loop_body
    %s27 = ssub.s32 %s22, 1
    %s28 = ssub.s32 %s22, 2
    %s29 = sadd.s32 %s22, 1
    %s30 = ssub.s32 %s22, %s29
    %p31 = scmp.eq.s32.totalorder %s30, 0
    %s33 = sadd.s32 %s32, 1
    %s34 = scalar_select %p31, %s32, %s33
    %p37 = pneg %p31
    %p38 = scmp.eq.s32.totalorder %s22, 1
    %p39 = por %p37, %p38
    %p40 = scmp.ne.s32.totalorder %s32, %s35
    %p41 = scmp.eq.s32.totalorder %s22, 0
    %p42 = por %p40, %p41
    %p43 = scmp.ne.s32.totalorder %s32, %s35
    %p44 = scmp.eq.s32.totalorder %s27, 1
    %p45 = por %p43, %p44
    %p46 = scmp.ne.s32.totalorder %s35, %s36
    %p47 = scmp.eq.s32.totalorder %s27, 0
    %p48 = por %p46, %p47
    %p49 = scmp.ne.s32.totalorder %s35, %s36
    %p50 = scmp.eq.s32.totalorder %s28, 1
    %p51 = por %p49, %p50
    %p53 = scmp.ne.s32.totalorder %s36, %s52
    %p54 = scmp.eq.s32.totalorder %s28, 0
    %p55 = por %p53, %p54
    %s56 = ssub.s32 %s22, %s29
    %p57 = scmp.eq.s32.totalorder %s56, 0
    %s59 = sadd.s32 %s58, 1
    %s60 = scalar_select %p57, %s58, %s59
    %p63 = pneg %p57
    %p64 = scmp.eq.s32.totalorder %s22, 1
    %p65 = por %p63, %p64
    %p66 = scmp.ne.s32.totalorder %s58, %s61
    %p67 = scmp.eq.s32.totalorder %s22, 0
    %p68 = por %p66, %p67
    %p69 = scmp.ne.s32.totalorder %s58, %s61
    %p70 = scmp.eq.s32.totalorder %s27, 1
    %p71 = por %p69, %p70
    %p72 = scmp.ne.s32.totalorder %s61, %s62
    %p73 = scmp.eq.s32.totalorder %s27, 0
    %p74 = por %p72, %p73
    %p75 = scmp.ne.s32.totalorder %s61, %s62
    %p76 = scmp.eq.s32.totalorder %s28, 1
    %p77 = por %p75, %p76
    %p79 = scmp.ne.s32.totalorder %s62, %s78
    %p80 = scmp.eq.s32.totalorder %s28, 0
    %p81 = por %p79, %p80
    %s83 = sadd.s32 %s82, 1
    %p86 = scmp.eq.s32.totalorder %s22, 1
    %p87 = scmp.ne.s32.totalorder %s82, %s84
    %p88 = scmp.eq.s32.totalorder %s22, 0
    %p89 = por %p87, %p88
    %p90 = scmp.ne.s32.totalorder %s82, %s84
    %p91 = scmp.eq.s32.totalorder %s27, 1
    %p92 = por %p90, %p91
    %p93 = scmp.ne.s32.totalorder %s84, %s85
    %p94 = scmp.eq.s32.totalorder %s27, 0
    %p95 = por %p93, %p94
    %p96 = scmp.ne.s32.totalorder %s84, %s85
    %p97 = scmp.eq.s32.totalorder %s28, 1
    %p98 = por %p96, %p97
    %p100 = scmp.ne.s32.totalorder %s85, %s99
    %p101 = scmp.eq.s32.totalorder %s28, 0
    %p102 = por %p100, %p101
    %s104 = sadd.s32 %s103, 1
    %p107 = scmp.eq.s32.totalorder %s22, 1
    %p108 = scmp.ne.s32.totalorder %s103, %s105
    %p109 = scmp.eq.s32.totalorder %s22, 0
    %p110 = por %p108, %p109
    %p111 = scmp.ne.s32.totalorder %s103, %s105
    %p112 = scmp.eq.s32.totalorder %s27, 1
    %p113 = por %p111, %p112
    %p114 = scmp.ne.s32.totalorder %s105, %s106
    %p115 = scmp.eq.s32.totalorder %s27, 0
    %p116 = por %p114, %p115
    %p117 = scmp.ne.s32.totalorder %s105, %s106
    %p118 = scmp.eq.s32.totalorder %s28, 1
    %p119 = por %p117, %p118
    %p121 = scmp.ne.s32.totalorder %s106, %s120
    %p122 = scmp.eq.s32.totalorder %s28, 0
    %p123 = por %p121, %p122
    %s125 = sadd.s32 %s124, 1
    %p128 = scmp.eq.s32.totalorder %s22, 1
    %p129 = scmp.ne.s32.totalorder %s124, %s126
    %p130 = scmp.eq.s32.totalorder %s22, 0
    %p131 = por %p129, %p130
    %p132 = scmp.ne.s32.totalorder %s124, %s126
    %p133 = scmp.eq.s32.totalorder %s27, 1
    %p134 = por %p132, %p133
    %p135 = scmp.ne.s32.totalorder %s126, %s127
    %p136 = scmp.eq.s32.totalorder %s27, 0
    %p137 = por %p135, %p136
    %p138 = scmp.ne.s32.totalorder %s126, %s127
    %p139 = scmp.eq.s32.totalorder %s28, 1
    %p140 = por %p138, %p139
    %p142 = scmp.ne.s32.totalorder %s127, %s141
    %p143 = scmp.eq.s32.totalorder %s28, 0
    %p144 = por %p142, %p143
    %s146 = sadd.s32 %s145, 1
    %p149 = scmp.eq.s32.totalorder %s22, 1
    %p150 = scmp.ne.s32.totalorder %s145, %s147
    %p151 = scmp.eq.s32.totalorder %s22, 0
    %p152 = por %p150, %p151
    %p153 = scmp.ne.s32.totalorder %s145, %s147
    %p154 = scmp.eq.s32.totalorder %s27, 1
    %p155 = por %p153, %p154
    %p156 = scmp.ne.s32.totalorder %s147, %s148
    %p157 = scmp.eq.s32.totalorder %s27, 0
    %p158 = por %p156, %p157
    %p159 = scmp.ne.s32.totalorder %s147, %s148
    %p160 = scmp.eq.s32.totalorder %s28, 1
    %p161 = por %p159, %p160
    %p163 = scmp.ne.s32.totalorder %s148, %s162
    %p164 = scmp.eq.s32.totalorder %s28, 0
    %p165 = por %p163, %p164
    %s167 = sadd.s32 %s166, 1
    %p170 = scmp.eq.s32.totalorder %s22, 1
    %p171 = scmp.ne.s32.totalorder %s166, %s168
    %p172 = scmp.eq.s32.totalorder %s22, 0
    %p173 = por %p171, %p172
    %p174 = scmp.ne.s32.totalorder %s166, %s168
    %p175 = scmp.eq.s32.totalorder %s27, 1
    %p176 = por %p174, %p175
    %p177 = scmp.ne.s32.totalorder %s168, %s169
    %p178 = scmp.eq.s32.totalorder %s27, 0
    %p179 = por %p177, %p178
    %p180 = scmp.ne.s32.totalorder %s168, %s169
    %p181 = scmp.eq.s32.totalorder %s28, 1
    %p182 = por %p180, %p181
    %p184 = scmp.ne.s32.totalorder %s169, %s183
    %p185 = scmp.eq.s32.totalorder %s28, 0
    %p186 = por %p184, %p185
    %s188 = sadd.s32 %s187, 1
    %p191 = scmp.eq.s32.totalorder %s22, 1
    %p192 = scmp.ne.s32.totalorder %s187, %s189
    %p193 = scmp.eq.s32.totalorder %s22, 0
    %p194 = por %p192, %p193
    %p195 = scmp.ne.s32.totalorder %s187, %s189
    %p196 = scmp.eq.s32.totalorder %s27, 1
    %p197 = por %p195, %p196
    %p198 = scmp.ne.s32.totalorder %s189, %s190
    %p199 = scmp.eq.s32.totalorder %s27, 0
    %p200 = por %p198, %p199
    %p201 = scmp.ne.s32.totalorder %s189, %s190
    %p202 = scmp.eq.s32.totalorder %s28, 1
    %p203 = por %p201, %p202
    %p205 = scmp.ne.s32.totalorder %s190, %s204
    %p206 = scmp.eq.s32.totalorder %s28, 0
    %p207 = por %p205, %p206
    %s209 = sadd.s32 %s208, 1
    %p212 = scmp.eq.s32.totalorder %s22, 1
    %p213 = scmp.ne.s32.totalorder %s208, %s210
    %p214 = scmp.eq.s32.totalorder %s22, 0
    %p215 = por %p213, %p214
    %p216 = scmp.ne.s32.totalorder %s208, %s210
    %p217 = scmp.eq.s32.totalorder %s27, 1
    %p218 = por %p216, %p217
    %p219 = scmp.ne.s32.totalorder %s210, %s211
    %p220 = scmp.eq.s32.totalorder %s27, 0
    %p221 = por %p219, %p220
    %p222 = scmp.ne.s32.totalorder %s210, %s211
    %p223 = scmp.eq.s32.totalorder %s28, 1
    %p224 = por %p222, %p223
    %p226 = scmp.ne.s32.totalorder %s211, %s225
    %p227 = scmp.eq.s32.totalorder %s28, 0
    %p228 = por %p226, %p227
    %s230 = sadd.s32 %s229, 1
    %p233 = scmp.eq.s32.totalorder %s22, 1
    %p234 = scmp.ne.s32.totalorder %s229, %s231
    %p235 = scmp.eq.s32.totalorder %s22, 0
    %p236 = por %p234, %p235
    %p237 = scmp.ne.s32.totalorder %s229, %s231
    %p238 = scmp.eq.s32.totalorder %s27, 1
    %p239 = por %p237, %p238
    %p240 = scmp.ne.s32.totalorder %s231, %s232
    %p241 = scmp.eq.s32.totalorder %s27, 0
    %p242 = por %p240, %p241
    %p243 = scmp.ne.s32.totalorder %s231, %s232
    %p244 = scmp.eq.s32.totalorder %s28, 1
    %p245 = por %p243, %p244
    %p247 = scmp.ne.s32.totalorder %s232, %s246
    %p248 = scmp.eq.s32.totalorder %s28, 0
    %p249 = por %p247, %p248
    %s251 = sadd.s32 %s250, 1
    %p254 = scmp.eq.s32.totalorder %s22, 1
    %p255 = scmp.ne.s32.totalorder %s250, %s252
    %p256 = scmp.eq.s32.totalorder %s22, 0
    %p257 = por %p255, %p256
    %p258 = scmp.ne.s32.totalorder %s250, %s252
    %p259 = scmp.eq.s32.totalorder %s27, 1
    %p260 = por %p258, %p259
    %p261 = scmp.ne.s32.totalorder %s252, %s253
    %p262 = scmp.eq.s32.totalorder %s27, 0
    %p263 = por %p261, %p262
    %p264 = scmp.ne.s32.totalorder %s252, %s253
    %p265 = scmp.eq.s32.totalorder %s28, 1
    %p266 = por %p264, %p265
    %p268 = scmp.ne.s32.totalorder %s253, %s267
    %p269 = scmp.eq.s32.totalorder %s28, 0
    %p270 = por %p268, %p269
    %s272 = sadd.s32 %s271, 1
    %p275 = scmp.eq.s32.totalorder %s22, 1
    %p276 = scmp.ne.s32.totalorder %s271, %s273
    %p277 = scmp.eq.s32.totalorder %s22, 0
    %p278 = por %p276, %p277
    %p279 = scmp.ne.s32.totalorder %s271, %s273
    %p280 = scmp.eq.s32.totalorder %s27, 1
    %p281 = por %p279, %p280
    %p282 = scmp.ne.s32.totalorder %s273, %s274
    %p283 = scmp.eq.s32.totalorder %s27, 0
    %p284 = por %p282, %p283
    %p285 = scmp.ne.s32.totalorder %s273, %s274
    %p286 = scmp.eq.s32.totalorder %s28, 1
    %p287 = por %p285, %p286
    %p289 = scmp.ne.s32.totalorder %s274, %s288
    %p290 = scmp.eq.s32.totalorder %s28, 0
    %p291 = por %p289, %p290
    %s293 = sadd.s32 %s292, 1
    %p296 = scmp.eq.s32.totalorder %s22, 1
    %p297 = scmp.ne.s32.totalorder %s292, %s294
    %p298 = scmp.eq.s32.totalorder %s22, 0
    %p299 = por %p297, %p298
    %p300 = scmp.ne.s32.totalorder %s292, %s294
    %p301 = scmp.eq.s32.totalorder %s27, 1
    %p302 = por %p300, %p301
    %p303 = scmp.ne.s32.totalorder %s294, %s295
    %p304 = scmp.eq.s32.totalorder %s27, 0
    %p305 = por %p303, %p304
    %p306 = scmp.ne.s32.totalorder %s294, %s295
    %p307 = scmp.eq.s32.totalorder %s28, 1
    %p308 = por %p306, %p307
    %p310 = scmp.ne.s32.totalorder %s295, %s309
    %p311 = scmp.eq.s32.totalorder %s28, 0
    %p312 = por %p310, %p311
    %s314 = sadd.s32 %s313, 1
    %p317 = scmp.eq.s32.totalorder %s22, 1
    %p318 = scmp.ne.s32.totalorder %s313, %s315
    %p319 = scmp.eq.s32.totalorder %s22, 0
    %p320 = por %p318, %p319
    %p321 = scmp.ne.s32.totalorder %s313, %s315
    %p322 = scmp.eq.s32.totalorder %s27, 1
    %p323 = por %p321, %p322
    %p324 = scmp.ne.s32.totalorder %s315, %s316
    %p325 = scmp.eq.s32.totalorder %s27, 0
    %p326 = por %p324, %p325
    %p327 = scmp.ne.s32.totalorder %s315, %s316
    %p328 = scmp.eq.s32.totalorder %s28, 1
    %p329 = por %p327, %p328
    %p331 = scmp.ne.s32.totalorder %s316, %s330
    %p332 = scmp.eq.s32.totalorder %s28, 0
    %p333 = por %p331, %p332
    %s335 = sadd.s32 %s334, 1
    %p338 = scmp.eq.s32.totalorder %s22, 1
    %p339 = scmp.ne.s32.totalorder %s334, %s336
    %p340 = scmp.eq.s32.totalorder %s22, 0
    %p341 = por %p339, %p340
    %p342 = scmp.ne.s32.totalorder %s334, %s336
    %p343 = scmp.eq.s32.totalorder %s27, 1
    %p344 = por %p342, %p343
    %p345 = scmp.ne.s32.totalorder %s336, %s337
    %p346 = scmp.eq.s32.totalorder %s27, 0
    %p347 = por %p345, %p346
    %p348 = scmp.ne.s32.totalorder %s336, %s337
    %p349 = scmp.eq.s32.totalorder %s28, 1
    %p350 = por %p348, %p349
    %p352 = scmp.ne.s32.totalorder %s337, %s351
    %p353 = scmp.eq.s32.totalorder %s28, 0
    %p354 = por %p352, %p353
    %s356 = sadd.s32 %s355, 1
    %p359 = scmp.eq.s32.totalorder %s22, 1
    %p360 = scmp.ne.s32.totalorder %s355, %s357
    %p361 = scmp.eq.s32.totalorder %s22, 0
    %p362 = por %p360, %p361
    %p363 = scmp.ne.s32.totalorder %s355, %s357
    %p364 = scmp.eq.s32.totalorder %s27, 1
    %p365 = por %p363, %p364
    %p366 = scmp.ne.s32.totalorder %s357, %s358
    %p367 = scmp.eq.s32.totalorder %s27, 0
    %p368 = por %p366, %p367
    %p369 = scmp.ne.s32.totalorder %s357, %s358
    %p370 = scmp.eq.s32.totalorder %s28, 1
    %p371 = por %p369, %p370
    %p373 = scmp.ne.s32.totalorder %s358, %s372
    %p374 = scmp.eq.s32.totalorder %s28, 0
    %p375 = por %p373, %p374
    %s376 = ssub.s32 %s22, %s29
    %p377 = scmp.eq.s32.totalorder %s376, 0
    %s379 = sadd.s32 %s378, 1
    %s380 = scalar_select %p377, %s378, %s379
    %p383 = pneg %p377
    %p384 = scmp.eq.s32.totalorder %s22, 1
    %p385 = por %p383, %p384
    %p386 = scmp.ne.s32.totalorder %s378, %s381
    %p387 = scmp.eq.s32.totalorder %s22, 0
    %p388 = por %p386, %p387
    %p389 = scmp.ne.s32.totalorder %s378, %s381
    %p390 = scmp.eq.s32.totalorder %s27, 1
    %p391 = por %p389, %p390
    %p392 = scmp.ne.s32.totalorder %s381, %s382
    %p393 = scmp.eq.s32.totalorder %s27, 0
    %p394 = por %p392, %p393
    %p395 = scmp.ne.s32.totalorder %s381, %s382
    %p396 = scmp.eq.s32.totalorder %s28, 1
    %p397 = por %p395, %p396
    %p399 = scmp.ne.s32.totalorder %s382, %s398
    %p400 = scmp.eq.s32.totalorder %s28, 0
    %p401 = por %p399, %p400
    %p402 = scmp.le.s32.totalorder 1, %s22
    %p403 = scmp.lt.s32.totalorder %s22, 3
    %p404 = pnand %p402, %p403
    %p405 = pneg %p404
    // Predicated region
    $region9: #{tpu_custom_call.1} parent=5 // pred_check
      _
    $region10: #{tpu_custom_call.1} parent=5 // pred_check_branch
      %407 = sbr.rel (%p404) target = $region12
    $region11: #{tpu_custom_call.1} parent=5 // pred_region
      %s408 = ssub.s32 %s22, 1
      // Predicated region
      $region13: #{tpu_custom_call.1} parent=11 // pred_check
        %p409 = pneg %p95
      $region14: #{tpu_custom_call.1} parent=11 // pred_check_branch
        %411 = sbr.rel (%p409) target = $region16
      $region15: #{tpu_custom_call.1} parent=11 // pred_region
        _
      $region16: #{tpu_custom_call.1} parent=11 // pred_fallthru
        _
      // Predicated region
      $region17: #{tpu_custom_call.1} parent=11 // pred_check
        %p412 = pneg %p116
      $region18: #{tpu_custom_call.1} parent=11 // pred_check_branch
        %414 = sbr.rel (%p412) target = $region20
      $region19: #{tpu_custom_call.1} parent=11 // pred_region
        _
      $region20: #{tpu_custom_call.1} parent=11 // pred_fallthru
        _
      // Predicated region
      $region21: #{tpu_custom_call.1} parent=11 // pred_check
        %p415 = pneg %p137
      $region22: #{tpu_custom_call.1} parent=11 // pred_check_branch
        %417 = sbr.rel (%p415) target = $region24
      $region23: #{tpu_custom_call.1} parent=11 // pred_region
        _
      $region24: #{tpu_custom_call.1} parent=11 // pred_fallthru
        _
      // Predicated region
      $region25: #{tpu_custom_call.1} parent=11 // pred_check
        %p418 = pneg %p158
      $region26: #{tpu_custom_call.1} parent=11 // pred_check_branch
        %420 = sbr.rel (%p418) target = $region28
      $region27: #{tpu_custom_call.1} parent=11 // pred_region
        _
      $region28: #{tpu_custom_call.1} parent=11 // pred_fallthru
        _
      // Predicated region
      $region29: #{tpu_custom_call.1} parent=11 // pred_check
        %p421 = pneg %p179
      $region30: #{tpu_custom_call.1} parent=11 // pred_check_branch
        %423 = sbr.rel (%p421) target = $region32
      $region31: #{tpu_custom_call.1} parent=11 // pred_region
        _
      $region32: #{tpu_custom_call.1} parent=11 // pred_fallthru
        _
      // Predicated region
      $region33: #{tpu_custom_call.1} parent=11 // pred_check
        %p424 = pneg %p200
      $region34: #{tpu_custom_call.1} parent=11 // pred_check_branch
        %426 = sbr.rel (%p424) target = $region36
      $region35: #{tpu_custom_call.1} parent=11 // pred_region
        _
      $region36: #{tpu_custom_call.1} parent=11 // pred_fallthru
        _
      // Predicated region
      $region37: #{tpu_custom_call.1} parent=11 // pred_check
        %p427 = pneg %p221
      $region38: #{tpu_custom_call.1} parent=11 // pred_check_branch
        %429 = sbr.rel (%p427) target = $region40
      $region39: #{tpu_custom_call.1} parent=11 // pred_region
        _
      $region40: #{tpu_custom_call.1} parent=11 // pred_fallthru
        _
      // Predicated region
      $region41: #{tpu_custom_call.1} parent=11 // pred_check
        %p430 = pneg %p242
      $region42: #{tpu_custom_call.1} parent=11 // pred_check_branch
        %432 = sbr.rel (%p430) target = $region44
      $region43: #{tpu_custom_call.1} parent=11 // pred_region
        _
      $region44: #{tpu_custom_call.1} parent=11 // pred_fallthru
        _
      // Predicated region
      $region45: #{tpu_custom_call.1} parent=11 // pred_check
        %p433 = pneg %p263
      $region46: #{tpu_custom_call.1} parent=11 // pred_check_branch
        %435 = sbr.rel (%p433) target = $region48
      $region47: #{tpu_custom_call.1} parent=11 // pred_region
        _
      $region48: #{tpu_custom_call.1} parent=11 // pred_fallthru
        _
      // Predicated region
      $region49: #{tpu_custom_call.1} parent=11 // pred_check
        %p436 = pneg %p284
      $region50: #{tpu_custom_call.1} parent=11 // pred_check_branch
        %438 = sbr.rel (%p436) target = $region52
      $region51: #{tpu_custom_call.1} parent=11 // pred_region
        _
      $region52: #{tpu_custom_call.1} parent=11 // pred_fallthru
        _
      // Predicated region
      $region53: #{tpu_custom_call.1} parent=11 // pred_check
        %p439 = pneg %p305
      $region54: #{tpu_custom_call.1} parent=11 // pred_check_branch
        %441 = sbr.rel (%p439) target = $region56
      $region55: #{tpu_custom_call.1} parent=11 // pred_region
        _
      $region56: #{tpu_custom_call.1} parent=11 // pred_fallthru
        _
      // Predicated region
      $region57: #{tpu_custom_call.1} parent=11 // pred_check
        %p442 = pneg %p326
      $region58: #{tpu_custom_call.1} parent=11 // pred_check_branch
        %444 = sbr.rel (%p442) target = $region60
      $region59: #{tpu_custom_call.1} parent=11 // pred_region
        _
      $region60: #{tpu_custom_call.1} parent=11 // pred_fallthru
        _
      // Predicated region
      $region61: #{tpu_custom_call.1} parent=11 // pred_check
        %p445 = pneg %p347
      $region62: #{tpu_custom_call.1} parent=11 // pred_check_branch
        %447 = sbr.rel (%p445) target = $region64
      $region63: #{tpu_custom_call.1} parent=11 // pred_region
        _
      $region64: #{tpu_custom_call.1} parent=11 // pred_fallthru
        _
      // Predicated region
      $region65: #{tpu_custom_call.1} parent=11 // pred_check
        %p448 = pneg %p368
      $region66: #{tpu_custom_call.1} parent=11 // pred_check_branch
        %450 = sbr.rel (%p448) target = $region68
      $region67: #{tpu_custom_call.1} parent=11 // pred_region
        _
      $region68: #{tpu_custom_call.1} parent=11 // pred_fallthru
        _
    $region12: #{tpu_custom_call.1} parent=5 // pred_fallthru
      _
    %p451 = scmp.lt.s32.totalorder %s22, 2
    // Predicated region
    $region69: #{tpu_custom_call.1} parent=5 // pred_check
      %p452 = pneg %p451
    $region70: #{tpu_custom_call.1} parent=5 // pred_check_branch
      %454 = sbr.rel (%p452) target = $region72
    $region71: #{tpu_custom_call.1} parent=5 // pred_region
      // Predicated region
      $region73: #{tpu_custom_call.1} parent=71 // pred_check
        %p455 = pneg %p42
      $region74: #{tpu_custom_call.1} parent=71 // pred_check_branch
        %457 = sbr.rel (%p455) target = $region76
      $region75: #{tpu_custom_call.1} parent=71 // pred_region
        %p458 = scmp.lt.s32.totalorder %s22, 1
        %s459 = scalar_select %p458, %s22, 1
        %s460 = smul.addr %s459, 8
        %s461 = smul.addr %s460, 8
        %s462 = scalar_lea.vmem %s0, %s461
      $region76: #{tpu_custom_call.1} parent=71 // pred_fallthru
        _
      // Predicated region
      $region77: #{tpu_custom_call.1} parent=71 // pred_check
        %p463 = pneg %p68
      $region78: #{tpu_custom_call.1} parent=71 // pred_check_branch
        %465 = sbr.rel (%p463) target = $region80
      $region79: #{tpu_custom_call.1} parent=71 // pred_region
        %p466 = scmp.lt.s32.totalorder %s22, 1
        %s467 = scalar_select %p466, %s22, 1
        %s468 = smul.addr %s467, 4
        %s469 = scalar_lea.vmem %s1, %s468
      $region80: #{tpu_custom_call.1} parent=71 // pred_fallthru
        _
    $region72: #{tpu_custom_call.1} parent=5 // pred_fallthru
      _
    %p470 = scmp.le.s32.totalorder 1, %s22
    %p471 = scmp.lt.s32.totalorder %s22, 3
    %p472 = pnand %p470, %p471
    %p473 = pneg %p472
    // Predicated region
    $region81: #{tpu_custom_call.1} parent=5 // pred_check
      _
    $region82: #{tpu_custom_call.1} parent=5 // pred_check_branch
      %475 = sbr.rel (%p472) target = $region84
    $region83: #{tpu_custom_call.1} parent=5 // pred_region
      %s476 = ssub.s32 %s22, 1
      %p477 = scmp.lt.s32.totalorder %s27, 1
      %s478 = scalar_select %p477, %s27, 1
      %s479 = smul.addr %s478, 8
      %s480 = smul.addr %s479, 8
      %s481 = scalar_lea.vmem %s0, %s480
      %p482 = pneg %p48
      %p483 = pneg %p45
      %p484 = scmp.lt.s32.totalorder %s27, 1
      %s485 = scalar_select %p484, %s27, 1
      %s486 = smul.addr %s485, 4
      %s487 = scalar_lea.vmem %s1, %s486
      %p488 = pneg %p74
      %p489 = pneg %p71
      %p490 = pneg %p95
      %p491 = pneg %p92
      %p492 = pneg %p116
      %p493 = pneg %p113
      %p494 = pneg %p137
      %p495 = pneg %p134
      %p496 = pneg %p158
      %p497 = pneg %p155
      %p498 = pneg %p179
      %p499 = pneg %p176
      %p500 = pneg %p200
      %p501 = pneg %p197
      %p502 = pneg %p221
      %p503 = pneg %p218
      %p504 = pneg %p242
      %p505 = pneg %p239
      %p506 = pneg %p263
      %p507 = pneg %p260
      %p508 = pneg %p284
      %p509 = pneg %p281
      %p510 = pneg %p305
      %p511 = pneg %p302
      %p512 = pneg %p326
      %p513 = pneg %p323
      %p514 = pneg %p347
      %p515 = pneg %p344
      %p516 = pneg %p368
      %p517 = pneg %p365
      %p518 = pneg %p394
      %p519 = pneg %p391
      %p520 = scmp.lt.s32.totalorder %s27, 1
      %s521 = scalar_select %p520, %s27, 1
      %s522 = smul.addr %s521, 8
      %s523 = smul.addr %s522, 8
      %s524 = scalar_lea.vmem %s16, %s523
      %p525 = scmp.lt.s32.totalorder %s27, 1
      %s526 = scalar_select %p525, %s27, 1
      %s527 = smul.addr %s526, 8
      %s528 = smul.addr %s527, 8
      %s529 = scalar_lea.vmem %s0, %s528
      %p530 = scmp.lt.s32.totalorder %s27, 1
      %s531 = scalar_select %p530, %s27, 1
      %s532 = smul.addr %s531, 4
      %s533 = scalar_lea.vmem %s1, %s532
      %p534 = scmp.lt.s32.totalorder %s27, 1
      %s535 = scalar_select %p534, %s27, 1
      %s536 = smul.addr %s535, 8
      %s537 = smul.addr %s536, 8
      %s538 = scalar_lea.vmem %s16, %s537
      %v539 = vld [vmem:[%s529] sm:$0xff]
      %v540 = vld [vmem:[%s529 + $0x8] sm:$0xff]
      %v541 = vld [vmem:[%s529 + $0x10] sm:$0xff]
      %v542 = vld [vmem:[%s529 + $0x18] sm:$0xff]
      %v543 = vld [vmem:[%s529 + $0x20] sm:$0xff]
      %v544 = vld [vmem:[%s529 + $0x28] sm:$0xff]
      %v545 = vld [vmem:[%s529 + $0x30] sm:$0xff]
      %v546 = vld [vmem:[%s529 + $0x38] sm:$0xff]
      %v547 = vld [vmem:[%s533] sm:$0xf]
      %v548 = vld [vmem:[%s2] sm:$0xff]
      %v549 = vld [vmem:[%s2 + $0x8] sm:$0xff]
      %v550 = vld [vmem:[%s2 + $0x10] sm:$0xff]
      %v551 = vld [vmem:[%s2 + $0x18] sm:$0xff]
      %v552 = vld [vmem:[%s2 + $0x20] sm:$0xff]
      %v553 = vld [vmem:[%s2 + $0x28] sm:$0xff]
      %v554 = vld [vmem:[%s2 + $0x30] sm:$0xff]
      %v555 = vld [vmem:[%s2 + $0x38] sm:$0xff]
      %v556 = vld [vmem:[%s2 + $0x40] sm:$0xff]
      %v557 = vld [vmem:[%s2 + $0x48] sm:$0xff]
      %v558 = vld [vmem:[%s2 + $0x50] sm:$0xff]
      %v559 = vld [vmem:[%s2 + $0x58] sm:$0xff]
      %v560 = vld [vmem:[%s2 + $0x60] sm:$0xff]
      %v561 = vld [vmem:[%s2 + $0x68] sm:$0xff]
      %v562 = vld [vmem:[%s2 + $0x70] sm:$0xff]
      %v563 = vld [vmem:[%s2 + $0x78] sm:$0xff]
      %v564 = vld [vmem:[%s2 + $0x80] sm:$0xff]
      %v565 = vld [vmem:[%s2 + $0x88] sm:$0xff]
      %v566 = vld [vmem:[%s2 + $0x90] sm:$0xff]
      %v567 = vld [vmem:[%s2 + $0x98] sm:$0xff]
      %v568 = vld [vmem:[%s2 + $0xa0] sm:$0xff]
      %v569 = vld [vmem:[%s2 + $0xa8] sm:$0xff]
      %v570 = vld [vmem:[%s2 + $0xb0] sm:$0xff]
      %v571 = vld [vmem:[%s2 + $0xb8] sm:$0xff]
      %v572 = vld [vmem:[%s2 + $0xc0] sm:$0xff]
      %v573 = vld [vmem:[%s2 + $0xc8] sm:$0xff]
      %v574 = vld [vmem:[%s2 + $0xd0] sm:$0xff]
      %v575 = vld [vmem:[%s2 + $0xd8] sm:$0xff]
      %v576 = vld [vmem:[%s2 + $0xe0] sm:$0xff]
      %v577 = vld [vmem:[%s2 + $0xe8] sm:$0xff]
      %v578 = vld [vmem:[%s2 + $0xf0] sm:$0xff]
      %v579 = vld [vmem:[%s2 + $0xf8] sm:$0xff]
      %v580 = vld [vmem:[%s2 + $0x100] sm:$0xff]
      %v581 = vld [vmem:[%s2 + $0x108] sm:$0xff]
      %v582 = vld [vmem:[%s2 + $0x110] sm:$0xff]
      %v583 = vld [vmem:[%s2 + $0x118] sm:$0xff]
      %v584 = vld [vmem:[%s2 + $0x120] sm:$0xff]
      %v585 = vld [vmem:[%s2 + $0x128] sm:$0xff]
      %v586 = vld [vmem:[%s2 + $0x130] sm:$0xff]
      %v587 = vld [vmem:[%s2 + $0x138] sm:$0xff]
      %v588 = vld [vmem:[%s2 + $0x140] sm:$0xff]
      %v589 = vld [vmem:[%s2 + $0x148] sm:$0xff]
      %v590 = vld [vmem:[%s2 + $0x150] sm:$0xff]
      %v591 = vld [vmem:[%s2 + $0x158] sm:$0xff]
      %v592 = vld [vmem:[%s2 + $0x160] sm:$0xff]
      %v593 = vld [vmem:[%s2 + $0x168] sm:$0xff]
      %v594 = vld [vmem:[%s2 + $0x170] sm:$0xff]
      %v595 = vld [vmem:[%s2 + $0x178] sm:$0xff]
      %v596 = vld [vmem:[%s2 + $0x180] sm:$0xff]
      %v597 = vld [vmem:[%s2 + $0x188] sm:$0xff]
      %v598 = vld [vmem:[%s2 + $0x190] sm:$0xff]
      %v599 = vld [vmem:[%s2 + $0x198] sm:$0xff]
      %v600 = vld [vmem:[%s2 + $0x1a0] sm:$0xff]
      %v601 = vld [vmem:[%s2 + $0x1a8] sm:$0xff]
      %v602 = vld [vmem:[%s2 + $0x1b0] sm:$0xff]
      %v603 = vld [vmem:[%s2 + $0x1b8] sm:$0xff]
      %v604 = vld [vmem:[%s2 + $0x1c0] sm:$0xff]
      %v605 = vld [vmem:[%s2 + $0x1c8] sm:$0xff]
      %v606 = vld [vmem:[%s2 + $0x1d0] sm:$0xff]
      %v607 = vld [vmem:[%s2 + $0x1d8] sm:$0xff]
      %v608 = vld [vmem:[%s2 + $0x1e0] sm:$0xff]
      %v609 = vld [vmem:[%s2 + $0x1e8] sm:$0xff]
      %v610 = vld [vmem:[%s2 + $0x1f0] sm:$0xff]
      %v611 = vld [vmem:[%s2 + $0x1f8] sm:$0xff]
      %v612 = vld [vmem:[%s3] sm:$0x1]
      %v614 = vlaneseq
      %v615 = vshrl.u32 %v614, 7
      %v616 = vsub.s32 0, %v615
      %v617 = vrot.slane %v547, %v616
      %v618 = vlaneseq
      %v619 = vshrl.u32 %v618, 7
      %v620 = vsub.s32 1, %v619
      %v621 = vrot.slane %v547, %v620
      %v622 = vlaneseq
      %v623 = vshrl.u32 %v622, 7
      %v624 = vsub.s32 2, %v623
      %v625 = vrot.slane %v547, %v624
      %v626 = vlaneseq
      %v627 = vshrl.u32 %v626, 7
      %v628 = vsub.s32 3, %v627
      %v629 = vrot.slane %v547, %v628
      %634 = vmatprep.subr.mxu0 0.0
      %635 = vmatpush1.msra.mxu0 %v548
      %636 = vmatprep.subr.mxu0 0.0
      %637 = vmatpush1.msra.mxu0 %v549
      %638 = vmatprep.subr.mxu0 0.0
      %639 = vmatpush1.msra.mxu0 %v550
      %640 = vmatprep.subr.mxu0 0.0
      %641 = vmatpush1.msra.mxu0 %v551
      %642 = vmatprep.subr.mxu0 0.0
      %643 = vmatpush1.msra.mxu0 %v552
      %644 = vmatprep.subr.mxu0 0.0
      %645 = vmatpush1.msra.mxu0 %v553
      %646 = vmatprep.subr.mxu0 0.0
      %647 = vmatpush1.msra.mxu0 %v554
      %648 = vmatprep.subr.mxu0 0.0
      %649 = vmatpush1.msra.mxu0 %v555
      %650 = vmatprep.subr.mxu0 0.0
      %651 = vmatpush1.msra.mxu0 %v556
      %652 = vmatprep.subr.mxu0 0.0
      %653 = vmatpush1.msra.mxu0 %v557
      %654 = vmatprep.subr.mxu0 0.0
      %655 = vmatpush1.msra.mxu0 %v558
      %656 = vmatprep.subr.mxu0 0.0
      %657 = vmatpush1.msra.mxu0 %v559
      %658 = vmatprep.subr.mxu0 0.0
      %659 = vmatpush1.msra.mxu0 %v560
      %660 = vmatprep.subr.mxu0 0.0
      %661 = vmatpush1.msra.mxu0 %v561
      %662 = vmatprep.subr.mxu0 0.0
      %663 = vmatpush1.msra.mxu0 %v562
      %664 = vmatprep.subr.mxu0 0.0
      %665 = vmatpush1.msra.mxu0 %v563
      %666 = vmatprep.subr.mxu0 0.0
      %667 = vmatpush1.msra.mxu0 %v564
      %668 = vmatprep.subr.mxu0 0.0
      %669 = vmatpush1.msra.mxu0 %v565
      %670 = vmatprep.subr.mxu0 0.0
      %671 = vmatpush1.msra.mxu0 %v566
      %672 = vmatprep.subr.mxu0 0.0
      %673 = vmatpush1.msra.mxu0 %v567
      %674 = vmatprep.subr.mxu0 0.0
      %675 = vmatpush1.msra.mxu0 %v568
      %676 = vmatprep.subr.mxu0 0.0
      %677 = vmatpush1.msra.mxu0 %v569
      %678 = vmatprep.subr.mxu0 0.0
      %679 = vmatpush1.msra.mxu0 %v570
      %680 = vmatprep.subr.mxu0 0.0
      %681 = vmatpush1.msra.mxu0 %v571
      %682 = vmatprep.subr.mxu0 0.0
      %683 = vmatpush1.msra.mxu0 %v572
      %684 = vmatprep.subr.mxu0 0.0
      %685 = vmatpush1.msra.mxu0 %v573
      %686 = vmatprep.subr.mxu0 0.0
      %687 = vmatpush1.msra.mxu0 %v574
      %688 = vmatprep.subr.mxu0 0.0
      %689 = vmatpush1.msra.mxu0 %v575
      %690 = vmatprep.subr.mxu0 0.0
      %691 = vmatpush1.msra.mxu0 %v576
      %692 = vmatprep.subr.mxu0 0.0
      %693 = vmatpush1.msra.mxu0 %v577
      %694 = vmatprep.subr.mxu0 0.0
      %695 = vmatpush1.msra.mxu0 %v578
      %696 = vmatprep.subr.mxu0 0.0
      %697 = vmatpush1.msra.mxu0 %v579
      %698 = vmatprep.mubr.f32.mxu0 %v621
      %699 = vmatmul.mubr.f32.gmra.mrb[0].mxu0 %v617
      %v700 = vpop.f32.mrb[0].mxu0
      %v701 = vadd.f32 %v612, %v700
      %v702 = vpop.f32.mrb[0].mxu0
      %703 = vdwg.mxu0
      %704 = vmatprep.subr.mxu0 0.0
      %705 = vmatpush1.msra.mxu0 %v580
      %706 = vmatprep.subr.mxu0 0.0
      %707 = vmatpush1.msra.mxu0 %v581
      %708 = vmatprep.subr.mxu0 0.0
      %709 = vmatpush1.msra.mxu0 %v582
      %710 = vmatprep.subr.mxu0 0.0
      %711 = vmatpush1.msra.mxu0 %v583
      %712 = vmatprep.subr.mxu0 0.0
      %713 = vmatpush1.msra.mxu0 %v584
      %714 = vmatprep.subr.mxu0 0.0
      %715 = vmatpush1.msra.mxu0 %v585
      %716 = vmatprep.subr.mxu0 0.0
      %717 = vmatpush1.msra.mxu0 %v586
      %718 = vmatprep.subr.mxu0 0.0
      %719 = vmatpush1.msra.mxu0 %v587
      %720 = vmatprep.subr.mxu0 0.0
      %721 = vmatpush1.msra.mxu0 %v588
      %722 = vmatprep.subr.mxu0 0.0
      %723 = vmatpush1.msra.mxu0 %v589
      %724 = vmatprep.subr.mxu0 0.0
      %725 = vmatpush1.msra.mxu0 %v590
      %726 = vmatprep.subr.mxu0 0.0
      %727 = vmatpush1.msra.mxu0 %v591
      %728 = vmatprep.subr.mxu0 0.0
      %729 = vmatpush1.msra.mxu0 %v592
      %730 = vmatprep.subr.mxu0 0.0
      %731 = vmatpush1.msra.mxu0 %v593
      %732 = vmatprep.subr.mxu0 0.0
      %733 = vmatpush1.msra.mxu0 %v594
      %734 = vmatprep.subr.mxu0 0.0
      %735 = vmatpush1.msra.mxu0 %v595
      %736 = vmatprep.subr.mxu0 0.0
      %737 = vmatpush1.msra.mxu0 %v596
      %738 = vmatprep.subr.mxu0 0.0
      %739 = vmatpush1.msra.mxu0 %v597
      %740 = vmatprep.subr.mxu0 0.0
      %741 = vmatpush1.msra.mxu0 %v598
      %742 = vmatprep.subr.mxu0 0.0
      %743 = vmatpush1.msra.mxu0 %v599
      %744 = vmatprep.subr.mxu0 0.0
      %745 = vmatpush1.msra.mxu0 %v600
      %746 = vmatprep.subr.mxu0 0.0
      %747 = vmatpush1.msra.mxu0 %v601
      %748 = vmatprep.subr.mxu0 0.0
      %749 = vmatpush1.msra.mxu0 %v602
      %750 = vmatprep.subr.mxu0 0.0
      %751 = vmatpush1.msra.mxu0 %v603
      %752 = vmatprep.subr.mxu0 0.0
      %753 = vmatpush1.msra.mxu0 %v604
      %754 = vmatprep.subr.mxu0 0.0
      %755 = vmatpush1.msra.mxu0 %v605
      %756 = vmatprep.subr.mxu0 0.0
      %757 = vmatpush1.msra.mxu0 %v606
      %758 = vmatprep.subr.mxu0 0.0
      %759 = vmatpush1.msra.mxu0 %v607
      %760 = vmatprep.subr.mxu0 0.0
      %761 = vmatpush1.msra.mxu0 %v608
      %762 = vmatprep.subr.mxu0 0.0
      %763 = vmatpush1.msra.mxu0 %v609
      %764 = vmatprep.subr.mxu0 0.0
      %765 = vmatpush1.msra.mxu0 %v610
      %766 = vmatprep.subr.mxu0 0.0
      %767 = vmatpush1.msra.mxu0 %v611
      %768 = vmatprep.mubr.f32.mxu0 %v629
      %769 = vmatmul.mubr.f32.gmra.mrb[0].mxu0 %v625
      %v770 = vpop.f32.mrb[0].mxu0
      %v771 = vadd.f32 %v701, %v770
      %v772 = vpop.f32.mrb[0].mxu0
      %773 = vdwg.mxu0
      %v774 = vld [vmem:[%s4] sm:$0xff]
      %v775 = vld [vmem:[%s4 + $0x8] sm:$0xff]
      %v776 = vld [vmem:[%s5] sm:$0x1]
      %v778 = vlaneseq
      %v779 = vshrl.u32 %v778, 7
      %v780 = vsub.s32 0, %v779
      %v781 = vrot.slane %v776, %v780
      %vm783 = vcmask 130048
      %v785 = vsel %vm783, %v539, 0
      %v788 = vsel %vm783, %v540, 0
      %v791 = vsel %vm783, %v541, 0
      %v794 = vsel %vm783, %v542, 0
      %v797 = vsel %vm783, %v543, 0
      %v800 = vsel %vm783, %v544, 0
      %v803 = vsel %vm783, %v545, 0
      %v806 = vsel %vm783, %v546, 0
      %808 = vmatprep.subr.mxu0 0.0
      %809 = vmatpush1.msra.mxu0 %v774
      %810 = vmatprep.subr.mxu0 0.0
      %811 = vmatpush1.msra.mxu0 %v775
      %812 = vmatprep.subr.mxu0 0.0
      %813 = vmatpush1.msra.mxu0 0.0
      %814 = vmatprep.subr.mxu0 0.0
      %815 = vmatpush1.msra.mxu0 0.0
      %816 = vmatprep.subr.mxu0 0.0
      %817 = vmatpush1.msra.mxu0 0.0
      %818 = vmatprep.subr.mxu0 0.0
      %819 = vmatpush1.msra.mxu0 0.0
      %820 = vmatprep.subr.mxu0 0.0
      %821 = vmatpush1.msra.mxu0 0.0
      %822 = vmatprep.subr.mxu0 0.0
      %823 = vmatpush1.msra.mxu0 0.0
      %824 = vmatprep.subr.mxu0 0.0
      %825 = vmatpush1.msra.mxu0 0.0
      %826 = vmatprep.subr.mxu0 0.0
      %827 = vmatpush1.msra.mxu0 0.0
      %828 = vmatprep.subr.mxu0 0.0
      %829 = vmatpush1.msra.mxu0 0.0
      %830 = vmatprep.subr.mxu0 0.0
      %831 = vmatpush1.msra.mxu0 0.0
      %832 = vmatprep.subr.mxu0 0.0
      %833 = vmatpush1.msra.mxu0 0.0
      %834 = vmatprep.subr.mxu0 0.0
      %835 = vmatpush1.msra.mxu0 0.0
      %836 = vmatprep.subr.mxu0 0.0
      %837 = vmatpush1.msra.mxu0 0.0
      %838 = vmatprep.subr.mxu0 0.0
      %839 = vmatpush1.msra.mxu0 0.0
      %840 = vmatprep.subr.mxu0 0.0
      %841 = vmatpush1.msra.mxu0 0.0
      %842 = vmatprep.subr.mxu0 0.0
      %843 = vmatpush1.msra.mxu0 0.0
      %844 = vmatprep.subr.mxu0 0.0
      %845 = vmatpush1.msra.mxu0 0.0
      %846 = vmatprep.subr.mxu0 0.0
      %847 = vmatpush1.msra.mxu0 0.0
      %848 = vmatprep.subr.mxu0 0.0
      %849 = vmatpush1.msra.mxu0 0.0
      %850 = vmatprep.subr.mxu0 0.0
      %851 = vmatpush1.msra.mxu0 0.0
      %852 = vmatprep.subr.mxu0 0.0
      %853 = vmatpush1.msra.mxu0 0.0
      %854 = vmatprep.subr.mxu0 0.0
      %855 = vmatpush1.msra.mxu0 0.0
      %856 = vmatprep.subr.mxu0 0.0
      %857 = vmatpush1.msra.mxu0 0.0
      %858 = vmatprep.subr.mxu0 0.0
      %859 = vmatpush1.msra.mxu0 0.0
      %860 = vmatprep.subr.mxu0 0.0
      %861 = vmatpush1.msra.mxu0 0.0
      %862 = vmatprep.subr.mxu0 0.0
      %863 = vmatpush1.msra.mxu0 0.0
      %864 = vmatprep.subr.mxu0 0.0
      %865 = vmatpush1.msra.mxu0 0.0
      %866 = vmatprep.subr.mxu0 0.0
      %867 = vmatpush1.msra.mxu0 0.0
      %868 = vmatprep.subr.mxu0 0.0
      %869 = vmatpush1.msra.mxu0 0.0
      %870 = vmatprep.subr.mxu0 0.0
      %871 = vmatpush1.msra.mxu0 0.0
      %872 = vmatprep.mubr.f32.mxu0 0.0
      %873 = vmatmul.mubr.f32.gmra.mrb[0].mxu0 %v785
      %v874 = vpop.f32.mrb[0].mxu0
      %v875 = vadd.f32 %v781, %v874
      %v876 = vpop.f32.mrb[0].mxu0
      %877 = vmatprep.mubr.f32.mxu0 0.0
      %878 = vmatmul.mubr.f32.gmra.mrb[0].mxu0 %v788
      %v879 = vpop.f32.mrb[0].mxu0
      %v880 = vadd.f32 %v781, %v879
      %v881 = vpop.f32.mrb[0].mxu0
      %882 = vmatprep.mubr.f32.mxu0 0.0
      %883 = vmatmul.mubr.f32.gmra.mrb[0].mxu0 %v791
      %v884 = vpop.f32.mrb[0].mxu0
      %v885 = vadd.f32 %v781, %v884
      %v886 = vpop.f32.mrb[0].mxu0
      %887 = vmatprep.mubr.f32.mxu0 0.0
      %888 = vmatmul.mubr.f32.gmra.mrb[0].mxu0 %v794
      %v889 = vpop.f32.mrb[0].mxu0
      %v890 = vadd.f32 %v781, %v889
      %v891 = vpop.f32.mrb[0].mxu0
      %892 = vmatprep.mubr.f32.mxu0 0.0
      %893 = vmatmul.mubr.f32.gmra.mrb[0].mxu0 %v797
      %v894 = vpop.f32.mrb[0].mxu0
      %v895 = vadd.f32 %v781, %v894
      %v896 = vpop.f32.mrb[0].mxu0
      %897 = vmatprep.mubr.f32.mxu0 0.0
      %898 = vmatmul.mubr.f32.gmra.mrb[0].mxu0 %v800
      %v899 = vpop.f32.mrb[0].mxu0
      %v900 = vadd.f32 %v781, %v899
      %v901 = vpop.f32.mrb[0].mxu0
      %902 = vmatprep.mubr.f32.mxu0 0.0
      %903 = vmatmul.mubr.f32.gmra.mrb[0].mxu0 %v803
      %v904 = vpop.f32.mrb[0].mxu0
      %v905 = vadd.f32 %v781, %v904
      %v906 = vpop.f32.mrb[0].mxu0
      %907 = vmatprep.mubr.f32.mxu0 0.0
      %908 = vmatmul.mubr.f32.gmra.mrb[0].mxu0 %v806
      %v909 = vpop.f32.mrb[0].mxu0
      %v910 = vadd.f32 %v781, %v909
      %v911 = vpop.f32.mrb[0].mxu0
      %912 = vdwg.mxu0
      %v913 = vld [vmem:[%s6] sm:$0x1]
      %v914 = vld [vmem:[%s7] sm:$0x1]
      %v915 = vld [vmem:[%s8] sm:$0xff]
      %v916 = vld [vmem:[%s8 + $0x8] sm:$0xff]
      %v917 = vsel %vm783, %v539, 0.0
      %v918 = vsel %vm783, %v540, 0.0
      %v919 = vadd.f32 %v917, %v918
      %v920 = vsel %vm783, %v541, 0.0
      %v921 = vadd.f32 %v919, %v920
      %v922 = vsel %vm783, %v542, 0.0
      %v923 = vadd.f32 %v921, %v922
      %v924 = vsel %vm783, %v543, 0.0
      %v925 = vadd.f32 %v923, %v924
      %v926 = vsel %vm783, %v544, 0.0
      %v927 = vadd.f32 %v925, %v926
      %v928 = vsel %vm783, %v545, 0.0
      %v929 = vadd.f32 %v927, %v928
      %v930 = vsel %vm783, %v546, 0.0
      %v931 = vadd.f32 %v929, %v930
      %v932 = vrot.slane %v931, 4
      %v933 = vadd.f32 %v931, %v932
      %v934 = vrot.slane %v933, 2
      %v935 = vadd.f32 %v933, %v934
      %v936 = vrot.slane %v935, 1
      %v937 = vadd.f32 %v935, %v936
      %v939 = vsel %vm783, %v937, 0
      %941 = vmatprep.subr.mxu0 0.0
      %942 = vmatpush1.msra.mxu0 %v915
      %943 = vmatprep.subr.mxu0 0.0
      %944 = vmatpush1.msra.mxu0 %v916
      %945 = vmatprep.subr.mxu0 0.0
      %946 = vmatpush1.msra.mxu0 0.0
      %947 = vmatprep.subr.mxu0 0.0
      %948 = vmatpush1.msra.mxu0 0.0
      %949 = vmatprep.subr.mxu0 0.0
      %950 = vmatpush1.msra.mxu0 0.0
      %951 = vmatprep.subr.mxu0 0.0
      %952 = vmatpush1.msra.mxu0 0.0
      %953 = vmatprep.subr.mxu0 0.0
      %954 = vmatpush1.msra.mxu0 0.0
      %955 = vmatprep.subr.mxu0 0.0
      %956 = vmatpush1.msra.mxu0 0.0
      %957 = vmatprep.subr.mxu0 0.0
      %958 = vmatpush1.msra.mxu0 0.0
      %959 = vmatprep.subr.mxu0 0.0
      %960 = vmatpush1.msra.mxu0 0.0
      %961 = vmatprep.subr.mxu0 0.0
      %962 = vmatpush1.msra.mxu0 0.0
      %963 = vmatprep.subr.mxu0 0.0
      %964 = vmatpush1.msra.mxu0 0.0
      %965 = vmatprep.subr.mxu0 0.0
      %966 = vmatpush1.msra.mxu0 0.0
      %967 = vmatprep.subr.mxu0 0.0
      %968 = vmatpush1.msra.mxu0 0.0
      %969 = vmatprep.subr.mxu0 0.0
      %970 = vmatpush1.msra.mxu0 0.0
      %971 = vmatprep.subr.mxu0 0.0
      %972 = vmatpush1.msra.mxu0 0.0
      %973 = vmatprep.subr.mxu0 0.0
      %974 = vmatpush1.msra.mxu0 0.0
      %975 = vmatprep.subr.mxu0 0.0
      %976 = vmatpush1.msra.mxu0 0.0
      %977 = vmatprep.subr.mxu0 0.0
      %978 = vmatpush1.msra.mxu0 0.0
      %979 = vmatprep.subr.mxu0 0.0
      %980 = vmatpush1.msra.mxu0 0.0
      %981 = vmatprep.subr.mxu0 0.0
      %982 = vmatpush1.msra.mxu0 0.0
      %983 = vmatprep.subr.mxu0 0.0
      %984 = vmatpush1.msra.mxu0 0.0
      %985 = vmatprep.subr.mxu0 0.0
      %986 = vmatpush1.msra.mxu0 0.0
      %987 = vmatprep.subr.mxu0 0.0
      %988 = vmatpush1.msra.mxu0 0.0
      %989 = vmatprep.subr.mxu0 0.0
      %990 = vmatpush1.msra.mxu0 0.0
      %991 = vmatprep.subr.mxu0 0.0
      %992 = vmatpush1.msra.mxu0 0.0
      %993 = vmatprep.subr.mxu0 0.0
      %994 = vmatpush1.msra.mxu0 0.0
      %995 = vmatprep.subr.mxu0 0.0
      %996 = vmatpush1.msra.mxu0 0.0
      %997 = vmatprep.subr.mxu0 0.0
      %998 = vmatpush1.msra.mxu0 0.0
      %999 = vmatprep.subr.mxu0 0.0
      %1000 = vmatpush1.msra.mxu0 0.0
      %1001 = vmatprep.subr.mxu0 0.0
      %1002 = vmatpush1.msra.mxu0 0.0
      %1003 = vmatprep.subr.mxu0 0.0
      %1004 = vmatpush1.msra.mxu0 0.0
      %1005 = vmatprep.mubr.f32.mxu0 0.0
      %1006 = vmatmul.mubr.f32.gmra.mrb[0].mxu0 %v939
      %v1007 = vpop.f32.mrb[0].mxu0
      %v1008 = vadd.f32 0.0, %v1007
      %v1009 = vpop.f32.mrb[0].mxu0
      %1010 = vdwg.mxu0
      %v1011 = vlaneseq
      %v1012 = vshrl.u32 %v1011, 7
      %v1013 = vsub.s32 0, %v1012
      %v1014 = vrot.slane %v1008, %v1013
      %v1015 = vsub.f32 %v539, %v1014
      %v1016 = vsub.f32 %v540, %v1014
      %v1017 = vsub.f32 %v541, %v1014
      %v1018 = vsub.f32 %v542, %v1014
      %v1019 = vsub.f32 %v543, %v1014
      %v1020 = vsub.f32 %v544, %v1014
      %v1021 = vsub.f32 %v545, %v1014
      %v1022 = vsub.f32 %v546, %v1014
      %v1023 = vmul.f32 %v1015, %v1015
      %v1024 = vmul.f32 %v1016, %v1016
      %v1025 = vmul.f32 %v1017, %v1017
      %v1026 = vmul.f32 %v1018, %v1018
      %v1027 = vmul.f32 %v1019, %v1019
      %v1028 = vmul.f32 %v1020, %v1020
      %v1029 = vmul.f32 %v1021, %v1021
      %v1030 = vmul.f32 %v1022, %v1022
      %v1031 = vsel %vm783, %v1023, 0.0
      %v1032 = vsel %vm783, %v1024, 0.0
      %v1033 = vadd.f32 %v1031, %v1032
      %v1034 = vsel %vm783, %v1025, 0.0
      %v1035 = vadd.f32 %v1033, %v1034
      %v1036 = vsel %vm783, %v1026, 0.0
      %v1037 = vadd.f32 %v1035, %v1036
      %v1038 = vsel %vm783, %v1027, 0.0
      %v1039 = vadd.f32 %v1037, %v1038
      %v1040 = vsel %vm783, %v1028, 0.0
      %v1041 = vadd.f32 %v1039, %v1040
      %v1042 = vsel %vm783, %v1029, 0.0
      %v1043 = vadd.f32 %v1041, %v1042
      %v1044 = vsel %vm783, %v1030, 0.0
      %v1045 = vadd.f32 %v1043, %v1044
      %v1046 = vrot.slane %v1045, 4
      %v1047 = vadd.f32 %v1045, %v1046
      %v1048 = vrot.slane %v1047, 2
      %v1049 = vadd.f32 %v1047, %v1048
      %v1050 = vrot.slane %v1049, 1
      %v1051 = vadd.f32 %v1049, %v1050
      %v1053 = vsel %vm783, %v1051, 0
      %1055 = vmatprep.subr.mxu0 0.0
      %1056 = vmatpush1.msra.mxu0 %v915
      %1057 = vmatprep.subr.mxu0 0.0
      %1058 = vmatpush1.msra.mxu0 %v916
      %1059 = vmatprep.subr.mxu0 0.0
      %1060 = vmatpush1.msra.mxu0 0.0
      %1061 = vmatprep.subr.mxu0 0.0
      %1062 = vmatpush1.msra.mxu0 0.0
      %1063 = vmatprep.subr.mxu0 0.0
      %1064 = vmatpush1.msra.mxu0 0.0
      %1065 = vmatprep.subr.mxu0 0.0
      %1066 = vmatpush1.msra.mxu0 0.0
      %1067 = vmatprep.subr.mxu0 0.0
      %1068 = vmatpush1.msra.mxu0 0.0
      %1069 = vmatprep.subr.mxu0 0.0
      %1070 = vmatpush1.msra.mxu0 0.0
      %1071 = vmatprep.subr.mxu0 0.0
      %1072 = vmatpush1.msra.mxu0 0.0
      %1073 = vmatprep.subr.mxu0 0.0
      %1074 = vmatpush1.msra.mxu0 0.0
      %1075 = vmatprep.subr.mxu0 0.0
      %1076 = vmatpush1.msra.mxu0 0.0
      %1077 = vmatprep.subr.mxu0 0.0
      %1078 = vmatpush1.msra.mxu0 0.0
      %1079 = vmatprep.subr.mxu0 0.0
      %1080 = vmatpush1.msra.mxu0 0.0
      %1081 = vmatprep.subr.mxu0 0.0
      %1082 = vmatpush1.msra.mxu0 0.0
      %1083 = vmatprep.subr.mxu0 0.0
      %1084 = vmatpush1.msra.mxu0 0.0
      %1085 = vmatprep.subr.mxu0 0.0
      %1086 = vmatpush1.msra.mxu0 0.0
      %1087 = vmatprep.subr.mxu0 0.0
      %1088 = vmatpush1.msra.mxu0 0.0
      %1089 = vmatprep.subr.mxu0 0.0
      %1090 = vmatpush1.msra.mxu0 0.0
      %1091 = vmatprep.subr.mxu0 0.0
      %1092 = vmatpush1.msra.mxu0 0.0
      %1093 = vmatprep.subr.mxu0 0.0
      %1094 = vmatpush1.msra.mxu0 0.0
      %1095 = vmatprep.subr.mxu0 0.0
      %1096 = vmatpush1.msra.mxu0 0.0
      %1097 = vmatprep.subr.mxu0 0.0
      %1098 = vmatpush1.msra.mxu0 0.0
      %1099 = vmatprep.subr.mxu0 0.0
      %1100 = vmatpush1.msra.mxu0 0.0
      %1101 = vmatprep.subr.mxu0 0.0
      %1102 = vmatpush1.msra.mxu0 0.0
      %1103 = vmatprep.subr.mxu0 0.0
      %1104 = vmatpush1.msra.mxu0 0.0
      %1105 = vmatprep.subr.mxu0 0.0
      %1106 = vmatpush1.msra.mxu0 0.0
      %1107 = vmatprep.subr.mxu0 0.0
      %1108 = vmatpush1.msra.mxu0 0.0
      %1109 = vmatprep.subr.mxu0 0.0
      %1110 = vmatpush1.msra.mxu0 0.0
      %1111 = vmatprep.subr.mxu0 0.0
      %1112 = vmatpush1.msra.mxu0 0.0
      %1113 = vmatprep.subr.mxu0 0.0
      %1114 = vmatpush1.msra.mxu0 0.0
      %1115 = vmatprep.subr.mxu0 0.0
      %1116 = vmatpush1.msra.mxu0 0.0
      %1117 = vmatprep.subr.mxu0 0.0
      %1118 = vmatpush1.msra.mxu0 0.0
      %1119 = vmatprep.mubr.f32.mxu0 0.0
      %1120 = vmatmul.mubr.f32.gmra.mrb[0].mxu0 %v1053
      %v1121 = vpop.f32.mrb[0].mxu0
      %v1122 = vadd.f32 1e-05, %v1121
      %v1123 = vpop.f32.mrb[0].mxu0
      %1124 = vdwg.mxu0
      %v1125 = vrsqrt.pop %v1122
      %v1126 = vlaneseq
      %v1127 = vshrl.u32 %v1126, 7
      %v1128 = vsub.s32 0, %v1127
      %v1129 = vrot.slane %v1125, %v1128
      %v1130 = vmul.f32 %v1015, %v1129
      %v1131 = vmul.f32 %v1016, %v1129
      %v1132 = vmul.f32 %v1017, %v1129
      %v1133 = vmul.f32 %v1018, %v1129
      %v1134 = vmul.f32 %v1019, %v1129
      %v1135 = vmul.f32 %v1020, %v1129
      %v1136 = vmul.f32 %v1021, %v1129
      %v1137 = vmul.f32 %v1022, %v1129
      %v1139 = vlaneseq
      %v1140 = vshrl.u32 %v1139, 7
      %v1141 = vsub.s32 0, %v1140
      %v1142 = vrot.slane %v913, %v1141
      %v1144 = vmul.f32 %v1130, %v1142
      %v1145 = vmul.f32 %v1131, %v1142
      %v1146 = vmul.f32 %v1132, %v1142
      %v1147 = vmul.f32 %v1133, %v1142
      %v1148 = vmul.f32 %v1134, %v1142
      %v1149 = vmul.f32 %v1135, %v1142
      %v1150 = vmul.f32 %v1136, %v1142
      %v1151 = vmul.f32 %v1137, %v1142
      %v1153 = vlaneseq
      %v1154 = vshrl.u32 %v1153, 7
      %v1155 = vsub.s32 0, %v1154
      %v1156 = vrot.slane %v914, %v1155
      %v1158 = vadd.f32 %v1144, %v1156
      %v1159 = vadd.f32 %v1145, %v1156
      %v1160 = vadd.f32 %v1146, %v1156
      %v1161 = vadd.f32 %v1147, %v1156
      %v1162 = vadd.f32 %v1148, %v1156
      %v1163 = vadd.f32 %v1149, %v1156
      %v1164 = vadd.f32 %v1150, %v1156
      %v1165 = vadd.f32 %v1151, %v1156
      %v1166 = vxor.u32 %v1158, 2147483648
      %v1167 = vxor.u32 %v1159, 2147483648
      %v1168 = vxor.u32 %v1160, 2147483648
      %v1169 = vxor.u32 %v1161, 2147483648
      %v1170 = vxor.u32 %v1162, 2147483648
      %v1171 = vxor.u32 %v1163, 2147483648
      %v1172 = vxor.u32 %v1164, 2147483648
      %v1173 = vxor.u32 %v1165, 2147483648
      %v1174 = vmul.f32 %v1166, 1.442695
      %v1175 = vpow.pop %v1174
      %v1176 = vmul.f32 %v1167, 1.442695
      %v1177 = vpow.pop %v1176
      %v1178 = vmul.f32 %v1168, 1.442695
      %v1179 = vpow.pop %v1178
      %v1180 = vmul.f32 %v1169, 1.442695
      %v1181 = vpow.pop %v1180
      %v1182 = vmul.f32 %v1170, 1.442695
      %v1183 = vpow.pop %v1182
      %v1184 = vmul.f32 %v1171, 1.442695
      %v1185 = vpow.pop %v1184
      %v1186 = vmul.f32 %v1172, 1.442695
      %v1187 = vpow.pop %v1186
      %v1188 = vmul.f32 %v1173, 1.442695
      %v1189 = vpow.pop %v1188
      %v1190 = vadd.f32 %v1175, 1.0
      %v1191 = vadd.f32 %v1177, 1.0
      %v1192 = vadd.f32 %v1179, 1.0
      %v1193 = vadd.f32 %v1181, 1.0
      %v1194 = vadd.f32 %v1183, 1.0
      %v1195 = vadd.f32 %v1185, 1.0
      %v1196 = vadd.f32 %v1187, 1.0
      %v1197 = vadd.f32 %v1189, 1.0
      %v1198 = vrcp.pop %v1190
      %v1199 = vmul.f32 1.0, %v1198
      %v1200 = vrcp.pop %v1191
      %v1201 = vmul.f32 1.0, %v1200
      %v1202 = vrcp.pop %v1192
      %v1203 = vmul.f32 1.0, %v1202
      %v1204 = vrcp.pop %v1193
      %v1205 = vmul.f32 1.0, %v1204
      %v1206 = vrcp.pop %v1194
      %v1207 = vmul.f32 1.0, %v1206
      %v1208 = vrcp.pop %v1195
      %v1209 = vmul.f32 1.0, %v1208
      %v1210 = vrcp.pop %v1196
      %v1211 = vmul.f32 1.0, %v1210
      %v1212 = vrcp.pop %v1197
      %v1213 = vmul.f32 1.0, %v1212
      %v1214 = vmul.f32 %v1158, %v1199
      %v1215 = vmul.f32 %v1159, %v1201
      %v1216 = vmul.f32 %v1160, %v1203
      %v1217 = vmul.f32 %v1161, %v1205
      %v1218 = vmul.f32 %v1162, %v1207
      %v1219 = vmul.f32 %v1163, %v1209
      %v1220 = vmul.f32 %v1164, %v1211
      %v1221 = vmul.f32 %v1165, %v1213
      %v1222 = vld [vmem:[%s9] sm:$0xff]
      %v1223 = vld [vmem:[%s9 + $0x8] sm:$0xff]
      %v1224 = vld [vmem:[%s9 + $0x10] sm:$0xff]
      %v1225 = vld [vmem:[%s9 + $0x18] sm:$0xff]
      %v1226 = vld [vmem:[%s9 + $0x20] sm:$0xff]
      %v1227 = vld [vmem:[%s9 + $0x28] sm:$0xff]
      %v1228 = vld [vmem:[%s9 + $0x30] sm:$0xff]
      %v1229 = vld [vmem:[%s9 + $0x38] sm:$0xff]
      %v1230 = vld [vmem:[%s9 + $0x40] sm:$0xff]
      %v1231 = vld [vmem:[%s9 + $0x48] sm:$0xff]
      %v1232 = vld [vmem:[%s9 + $0x50] sm:$0xff]
      %v1233 = vld [vmem:[%s9 + $0x58] sm:$0xff]
      %v1234 = vld [vmem:[%s9 + $0x60] sm:$0xff]
      %v1235 = vld [vmem:[%s9 + $0x68] sm:$0xff]
      %v1236 = vld [vmem:[%s9 + $0x70] sm:$0xff]
      %v1237 = vld [vmem:[%s9 + $0x78] sm:$0xff]
      %v1238 = vld [vmem:[%s9 + $0x80] sm:$0xff]
      %v1239 = vld [vmem:[%s9 + $0x88] sm:$0xff]
      %v1240 = vlaneseq
      %v1241 = vshrl.u32 %v1240, 7
      %v1242 = vadd.s32 %v1241, 8
      %v1243 = vadd.s32 %v1241, 16
      %v1244 = vadd.s32 %v1241, 24
      %v1245 = vadd.s32 %v1241, 32
      %v1246 = vadd.s32 %v1241, 40
      %v1247 = vadd.s32 %v1241, 48
      %v1248 = vadd.s32 %v1241, 56
      %vm1249 = vcmp.lt.s32.totalorder %v1241, 0
      %v1250 = vsub.s32 0, %v1241
      %v1251 = vsel %vm1249, %v1250, %v1241
      %v1252 = vshrl.u32 %v1251, 3
      %v1253 = vand.u32 %v1251, 7
      %v1254 = vsub.s32 0, %v1253
      %v1255 = vsel %vm1249, %v1254, %v1253
      %vm1256 = vcmp.lt.s32.totalorder %v1242, 0
      %v1257 = vsub.s32 0, %v1242
      %v1258 = vsel %vm1256, %v1257, %v1242
      %v1259 = vshrl.u32 %v1258, 3
      %v1260 = vand.u32 %v1258, 7
      %v1261 = vsub.s32 0, %v1260
      %v1262 = vsel %vm1256, %v1261, %v1260
      %vm1263 = vcmp.lt.s32.totalorder %v1243, 0
      %v1264 = vsub.s32 0, %v1243
      %v1265 = vsel %vm1263, %v1264, %v1243
      %v1266 = vshrl.u32 %v1265, 3
      %v1267 = vand.u32 %v1265, 7
      %v1268 = vsub.s32 0, %v1267
      %v1269 = vsel %vm1263, %v1268, %v1267
      %vm1270 = vcmp.lt.s32.totalorder %v1244, 0
      %v1271 = vsub.s32 0, %v1244
      %v1272 = vsel %vm1270, %v1271, %v1244
      %v1273 = vshrl.u32 %v1272, 3
      %v1274 = vand.u32 %v1272, 7
      %v1275 = vsub.s32 0, %v1274
      %v1276 = vsel %vm1270, %v1275, %v1274
      %vm1277 = vcmp.lt.s32.totalorder %v1245, 0
      %v1278 = vsub.s32 0, %v1245
      %v1279 = vsel %vm1277, %v1278, %v1245
      %v1280 = vshrl.u32 %v1279, 3
      %v1281 = vand.u32 %v1279, 7
      %v1282 = vsub.s32 0, %v1281
      %v1283 = vsel %vm1277, %v1282, %v1281
      %vm1284 = vcmp.lt.s32.totalorder %v1246, 0
      %v1285 = vsub.s32 0, %v1246
      %v1286 = vsel %vm1284, %v1285, %v1246
      %v1287 = vshrl.u32 %v1286, 3
      %v1288 = vand.u32 %v1286, 7
      %v1289 = vsub.s32 0, %v1288
      %v1290 = vsel %vm1284, %v1289, %v1288
      %vm1291 = vcmp.lt.s32.totalorder %v1247, 0
      %v1292 = vsub.s32 0, %v1247
      %v1293 = vsel %vm1291, %v1292, %v1247
      %v1294 = vshrl.u32 %v1293, 3
      %v1295 = vand.u32 %v1293, 7
      %v1296 = vsub.s32 0, %v1295
      %v1297 = vsel %vm1291, %v1296, %v1295
      %vm1298 = vcmp.lt.s32.totalorder %v1248, 0
      %v1299 = vsub.s32 0, %v1248
      %v1300 = vsel %vm1298, %v1299, %v1248
      %v1301 = vshrl.u32 %v1300, 3
      %v1302 = vand.u32 %v1300, 7
      %v1303 = vsub.s32 0, %v1302
      %v1304 = vsel %vm1298, %v1303, %v1302
      %vm1305 = vcmp.ne.s32.totalorder %v1255, 0
      %vm1306 = vcmp.ne.s32.totalorder %v1262, 0
      %vm1307 = vcmp.ne.s32.totalorder %v1269, 0
      %vm1308 = vcmp.ne.s32.totalorder %v1276, 0
      %vm1309 = vcmp.ne.s32.totalorder %v1283, 0
      %vm1310 = vcmp.ne.s32.totalorder %v1290, 0
      %vm1311 = vcmp.ne.s32.totalorder %v1297, 0
      %vm1312 = vcmp.ne.s32.totalorder %v1304, 0
      %vm1313 = vcmp.lt.s32.totalorder %v1255, 0
      %vm1314 = vcmp.lt.s32.totalorder %v1262, 0
      %vm1315 = vcmp.lt.s32.totalorder %v1269, 0
      %vm1316 = vcmp.lt.s32.totalorder %v1276, 0
      %vm1317 = vcmp.lt.s32.totalorder %v1283, 0
      %vm1318 = vcmp.lt.s32.totalorder %v1290, 0
      %vm1319 = vcmp.lt.s32.totalorder %v1297, 0
      %vm1320 = vcmp.lt.s32.totalorder %v1304, 0
      %vm1321 = vmand %vm1313, %vm1305
      %vm1322 = vmand %vm1314, %vm1306
      %vm1323 = vmand %vm1315, %vm1307
      %vm1324 = vmand %vm1316, %vm1308
      %vm1325 = vmand %vm1317, %vm1309
      %vm1326 = vmand %vm1318, %vm1310
      %vm1327 = vmand %vm1319, %vm1311
      %vm1328 = vmand %vm1320, %vm1312
      %v1329 = vadd.s32 %v1255, 8
      %v1330 = vadd.s32 %v1262, 8
      %v1331 = vadd.s32 %v1269, 8
      %v1332 = vadd.s32 %v1276, 8
      %v1333 = vadd.s32 %v1283, 8
      %v1334 = vadd.s32 %v1290, 8
      %v1335 = vadd.s32 %v1297, 8
      %v1336 = vadd.s32 %v1304, 8
      %v1337 = vsel %vm1321, %v1329, %v1255
      %v1338 = vsel %vm1322, %v1330, %v1262
      %v1339 = vsel %vm1323, %v1331, %v1269
      %v1340 = vsel %vm1324, %v1332, %v1276
      %v1341 = vsel %vm1325, %v1333, %v1283
      %v1342 = vsel %vm1326, %v1334, %v1290
      %v1343 = vsel %vm1327, %v1335, %v1297
      %v1344 = vsel %vm1328, %v1336, %v1304
      %vm1345 = vcmp.ge.s32.totalorder %v1337, 1
      %vm1346 = vcmp.ge.s32.totalorder %v1338, 1
      %vm1347 = vcmp.ge.s32.totalorder %v1339, 1
      %vm1348 = vcmp.ge.s32.totalorder %v1340, 1
      %vm1349 = vcmp.ge.s32.totalorder %v1341, 1
      %vm1350 = vcmp.ge.s32.totalorder %v1342, 1
      %vm1351 = vcmp.ge.s32.totalorder %v1343, 1
      %vm1352 = vcmp.ge.s32.totalorder %v1344, 1
      %v1353 = vsel %vm1345, 1, 0
      %v1354 = vsel %vm1346, 1, 0
      %v1355 = vsel %vm1347, 1, 0
      %v1356 = vsel %vm1348, 1, 0
      %v1357 = vsel %vm1349, 1, 0
      %v1358 = vsel %vm1350, 1, 0
      %v1359 = vsel %vm1351, 1, 0
      %v1360 = vsel %vm1352, 1, 0
      %v1361 = vcvt.s32.f32 %v1353
      %v1362 = vcvt.s32.f32 %v1354
      %v1363 = vcvt.s32.f32 %v1355
      %v1364 = vcvt.s32.f32 %v1356
      %v1365 = vcvt.s32.f32 %v1357
      %v1366 = vcvt.s32.f32 %v1358
      %v1367 = vcvt.s32.f32 %v1359
      %v1368 = vcvt.s32.f32 %v1360
      %vm1369 = vcmp.le.s32.totalorder %v1337, 6
      %vm1370 = vcmp.le.s32.totalorder %v1338, 6
      %vm1371 = vcmp.le.s32.totalorder %v1339, 6
      %vm1372 = vcmp.le.s32.totalorder %v1340, 6
      %vm1373 = vcmp.le.s32.totalorder %v1341, 6
      %vm1374 = vcmp.le.s32.totalorder %v1342, 6
      %vm1375 = vcmp.le.s32.totalorder %v1343, 6
      %vm1376 = vcmp.le.s32.totalorder %v1344, 6
      %v1377 = vsel %vm1369, 1, 0
      %v1378 = vsel %vm1370, 1, 0
      %v1379 = vsel %vm1371, 1, 0
      %v1380 = vsel %vm1372, 1, 0
      %v1381 = vsel %vm1373, 1, 0
      %v1382 = vsel %vm1374, 1, 0
      %v1383 = vsel %vm1375, 1, 0
      %v1384 = vsel %vm1376, 1, 0
      %v1385 = vcvt.s32.f32 %v1377
      %v1386 = vcvt.s32.f32 %v1378
      %v1387 = vcvt.s32.f32 %v1379
      %v1388 = vcvt.s32.f32 %v1380
      %v1389 = vcvt.s32.f32 %v1381
      %v1390 = vcvt.s32.f32 %v1382
      %v1391 = vcvt.s32.f32 %v1383
      %v1392 = vcvt.s32.f32 %v1384
      %vm1401 = vcmask 1046528
      %v1402 = vrot.slane %v1361, 1
      %v1403 = vrot.slane %v1362, 1
      %v1404 = vsel %vm1401, %v1402, %v1403
      %v1405 = vrot.slane %v1363, 1
      %v1406 = vsel %vm1401, %v1403, %v1405
      %v1407 = vrot.slane %v1364, 1
      %v1408 = vsel %vm1401, %v1405, %v1407
      %v1409 = vrot.slane %v1365, 1
      %v1410 = vsel %vm1401, %v1407, %v1409
      %v1411 = vrot.slane %v1366, 1
      %v1412 = vsel %vm1401, %v1409, %v1411
      %v1413 = vrot.slane %v1367, 1
      %v1414 = vsel %vm1401, %v1411, %v1413
      %v1415 = vrot.slane %v1368, 1
      %v1416 = vsel %vm1401, %v1413, %v1415
      %v1426 = vmul.f32 %v1402, 0.0
      %v1427 = vmul.f32 %v1214, %v1404
      %v1428 = vmul.f32 %v1215, %v1406
      %v1429 = vmul.f32 %v1216, %v1408
      %v1430 = vmul.f32 %v1217, %v1410
      %v1431 = vmul.f32 %v1218, %v1412
      %v1432 = vmul.f32 %v1219, %v1414
      %v1433 = vmul.f32 %v1220, %v1416
      %v1434 = vmul.f32 %v1221, %v1415
      %vm1443 = vcmask 1040384
      %v1444 = vrot.slane %v1385, 7
      %v1445 = vrot.slane %v1386, 7
      %v1446 = vsel %vm1443, %v1444, %v1445
      %v1447 = vrot.slane %v1387, 7
      %v1448 = vsel %vm1443, %v1445, %v1447
      %v1449 = vrot.slane %v1388, 7
      %v1450 = vsel %vm1443, %v1447, %v1449
      %v1451 = vrot.slane %v1389, 7
      %v1452 = vsel %vm1443, %v1449, %v1451
      %v1453 = vrot.slane %v1390, 7
      %v1454 = vsel %vm1443, %v1451, %v1453
      %v1455 = vrot.slane %v1391, 7
      %v1456 = vsel %vm1443, %v1453, %v1455
      %v1457 = vrot.slane %v1392, 7
      %v1458 = vsel %vm1443, %v1455, %v1457
      %v1468 = vmul.f32 %v1214, %v1444
      %v1469 = vmul.f32 %v1215, %v1446
      %v1470 = vmul.f32 %v1216, %v1448
      %v1471 = vmul.f32 %v1217, %v1450
      %v1472 = vmul.f32 %v1218, %v1452
      %v1473 = vmul.f32 %v1219, %v1454
      %v1474 = vmul.f32 %v1220, %v1456
      %v1475 = vmul.f32 %v1221, %v1458
      %v1476 = vmul.f32 %v1457, 0.0
      %v1485 = vrot.slane %v1214, 1
      %v1486 = vrot.slane %v1215, 1
      %v1487 = vsel %vm1401, %v1485, %v1486
      %v1488 = vrot.slane %v1216, 1
      %v1489 = vsel %vm1401, %v1486, %v1488
      %v1490 = vrot.slane %v1217, 1
      %v1491 = vsel %vm1401, %v1488, %v1490
      %v1492 = vrot.slane %v1218, 1
      %v1493 = vsel %vm1401, %v1490, %v1492
      %v1494 = vrot.slane %v1219, 1
      %v1495 = vsel %vm1401, %v1492, %v1494
      %v1496 = vrot.slane %v1220, 1
      %v1497 = vsel %vm1401, %v1494, %v1496
      %v1498 = vrot.slane %v1221, 1
      %v1499 = vsel %vm1401, %v1496, %v1498
      %1500 = vrot.lane.b32.xlu0 %v1485, 16
      %v1501 = vpop.permute.xlu0 %1500
      %1502 = vrot.lane.b32.xlu0 %v1487, 16
      %v1503 = vpop.permute.xlu0 %1502
      %1504 = vrot.lane.b32.xlu0 %v1489, 16
      %v1505 = vpop.permute.xlu0 %1504
      %1506 = vrot.lane.b32.xlu0 %v1491, 16
      %v1507 = vpop.permute.xlu0 %1506
      %1508 = vrot.lane.b32.xlu0 %v1493, 16
      %v1509 = vpop.permute.xlu0 %1508
      %1510 = vrot.lane.b32.xlu0 %v1495, 16
      %v1511 = vpop.permute.xlu0 %1510
      %1512 = vrot.lane.b32.xlu0 %v1497, 16
      %v1513 = vpop.permute.xlu0 %1512
      %1514 = vrot.lane.b32.xlu0 %v1499, 16
      %v1515 = vpop.permute.xlu0 %1514
      %1516 = vrot.lane.b32.xlu0 %v1498, 16
      %v1517 = vpop.permute.xlu0 %1516
      %vm1536 = vcmask 1045504
      %v1537 = vrot.slane %v1468, 2
      %v1538 = vrot.slane %v1469, 2
      %v1539 = vsel %vm1536, %v1537, %v1538
      %v1540 = vrot.slane %v1470, 2
      %v1541 = vsel %vm1536, %v1538, %v1540
      %v1542 = vrot.slane %v1471, 2
      %v1543 = vsel %vm1536, %v1540, %v1542
      %v1544 = vrot.slane %v1472, 2
      %v1545 = vsel %vm1536, %v1542, %v1544
      %v1546 = vrot.slane %v1473, 2
      %v1547 = vsel %vm1536, %v1544, %v1546
      %v1548 = vrot.slane %v1474, 2
      %v1549 = vsel %vm1536, %v1546, %v1548
      %v1550 = vrot.slane %v1475, 2
      %v1551 = vsel %vm1536, %v1548, %v1550
      %v1552 = vrot.slane %v1476, 2
      %v1553 = vsel %vm1536, %v1550, %v1552
      %1554 = vrot.lane.b32.xlu0 %v1537, 32
      %v1555 = vpop.permute.xlu0 %1554
      %1556 = vrot.lane.b32.xlu0 %v1539, 32
      %v1557 = vpop.permute.xlu0 %1556
      %1558 = vrot.lane.b32.xlu0 %v1541, 32
      %v1559 = vpop.permute.xlu0 %1558
      %1560 = vrot.lane.b32.xlu0 %v1543, 32
      %v1561 = vpop.permute.xlu0 %1560
      %1562 = vrot.lane.b32.xlu0 %v1545, 32
      %v1563 = vpop.permute.xlu0 %1562
      %1564 = vrot.lane.b32.xlu0 %v1547, 32
      %v1565 = vpop.permute.xlu0 %1564
      %1566 = vrot.lane.b32.xlu0 %v1549, 32
      %v1567 = vpop.permute.xlu0 %1566
      %1568 = vrot.lane.b32.xlu0 %v1551, 32
      %v1569 = vpop.permute.xlu0 %1568
      %1570 = vrot.lane.b32.xlu0 %v1553, 32
      %v1571 = vpop.permute.xlu0 %1570
      %v1581 = vsel %vm783, %v1426, %v1501
      %v1582 = vsel %vm783, %v1427, %v1503
      %v1583 = vsel %vm783, %v1428, %v1505
      %v1584 = vsel %vm783, %v1429, %v1507
      %v1585 = vsel %vm783, %v1430, %v1509
      %v1586 = vsel %vm783, %v1431, %v1511
      %v1587 = vsel %vm783, %v1432, %v1513
      %v1588 = vsel %vm783, %v1433, %v1515
      %v1589 = vsel %vm783, %v1434, %v1517
      %vm1590 = vcmask 261120
      %v1591 = vsel %vm1590, %v1581, %v1555
      %v1592 = vsel %vm1590, %v1582, %v1557
      %v1593 = vsel %vm1590, %v1583, %v1559
      %v1594 = vsel %vm1590, %v1584, %v1561
      %v1595 = vsel %vm1590, %v1585, %v1563
      %v1596 = vsel %vm1590, %v1586, %v1565
      %v1597 = vsel %vm1590, %v1587, %v1567
      %v1598 = vsel %vm1590, %v1588, %v1569
      %v1599 = vsel %vm1590, %v1589, %v1571
      %v1609 = vrot.slane %v1591, 7
      %v1610 = vrot.slane %v1592, 7
      %v1611 = vsel %vm1443, %v1609, %v1610
      %v1612 = vrot.slane %v1593, 7
      %v1613 = vsel %vm1443, %v1610, %v1612
      %v1614 = vrot.slane %v1594, 7
      %v1615 = vsel %vm1443, %v1612, %v1614
      %v1616 = vrot.slane %v1595, 7
      %v1617 = vsel %vm1443, %v1614, %v1616
      %v1618 = vrot.slane %v1596, 7
      %v1619 = vsel %vm1443, %v1616, %v1618
      %v1620 = vrot.slane %v1597, 7
      %v1621 = vsel %vm1443, %v1618, %v1620
      %v1622 = vrot.slane %v1598, 7
      %v1623 = vsel %vm1443, %v1620, %v1622
      %v1624 = vrot.slane %v1599, 7
      %v1625 = vsel %vm1443, %v1622, %v1624
      %1633 = vrot.lane.b32.xlu0 %v1611, 48
      %v1634 = vpop.permute.xlu0 %1633
      %1635 = vrot.lane.b32.xlu0 %v1613, 48
      %v1636 = vpop.permute.xlu0 %1635
      %1637 = vrot.lane.b32.xlu0 %v1615, 48
      %v1638 = vpop.permute.xlu0 %1637
      %1639 = vrot.lane.b32.xlu0 %v1617, 48
      %v1640 = vpop.permute.xlu0 %1639
      %1641 = vrot.lane.b32.xlu0 %v1619, 48
      %v1642 = vpop.permute.xlu0 %1641
      %1643 = vrot.lane.b32.xlu0 %v1621, 48
      %v1644 = vpop.permute.xlu0 %1643
      %1645 = vrot.lane.b32.xlu0 %v1623, 48
      %v1646 = vpop.permute.xlu0 %1645
      %1647 = vrot.lane.b32.xlu0 %v1625, 48
      %v1648 = vpop.permute.xlu0 %1647
      %1658 = vrot.lane.b32.xlu0 %v1613, 96
      %v1659 = vpop.permute.xlu0 %1658
      %1660 = vrot.lane.b32.xlu0 %v1615, 96
      %v1661 = vpop.permute.xlu0 %1660
      %1662 = vrot.lane.b32.xlu0 %v1617, 96
      %v1663 = vpop.permute.xlu0 %1662
      %1664 = vrot.lane.b32.xlu0 %v1619, 96
      %v1665 = vpop.permute.xlu0 %1664
      %1666 = vrot.lane.b32.xlu0 %v1621, 96
      %v1667 = vpop.permute.xlu0 %1666
      %1668 = vrot.lane.b32.xlu0 %v1623, 96
      %v1669 = vpop.permute.xlu0 %1668
      %1670 = vrot.lane.b32.xlu0 %v1625, 96
      %v1671 = vpop.permute.xlu0 %1670
      %1672 = vrot.lane.b32.xlu0 0.0, 96
      %v1673 = vpop.permute.xlu0 %1672
      %vm1682 = vcmask 392192
      %v1683 = vsel %vm1682, 0.0, %v1634
      %v1684 = vsel %vm1682, %v1611, %v1636
      %v1685 = vsel %vm1682, %v1613, %v1638
      %v1686 = vsel %vm1682, %v1615, %v1640
      %v1687 = vsel %vm1682, %v1617, %v1642
      %v1688 = vsel %vm1682, %v1619, %v1644
      %v1689 = vsel %vm1682, %v1621, %v1646
      %v1690 = vsel %vm1682, %v1623, %v1648
      %vm1691 = vcmask 785408
      %v1692 = vsel %vm1691, %v1683, %v1659
      %v1693 = vsel %vm1691, %v1684, %v1661
      %v1694 = vsel %vm1691, %v1685, %v1663
      %v1695 = vsel %vm1691, %v1686, %v1665
      %v1696 = vsel %vm1691, %v1687, %v1667
      %v1697 = vsel %vm1691, %v1688, %v1669
      %v1698 = vsel %vm1691, %v1689, %v1671
      %v1699 = vsel %vm1691, %v1690, %v1673
      %v1700 = vld [vmem:[%s10] sm:$0x1]
      %v1702 = vlaneseq
      %v1703 = vshrl.u32 %v1702, 7
      %v1704 = vsub.s32 0, %v1703
      %v1705 = vrot.slane %v1700, %v1704
      %v1707 = vsel %vm783, %v1659, 0
      %v1709 = vsel %vm783, %v1661, 0
      %v1711 = vsel %vm783, %v1663, 0
      %v1713 = vsel %vm783, %v1665, 0
      %v1715 = vsel %vm783, %v1667, 0
      %v1717 = vsel %vm783, %v1669, 0
      %v1719 = vsel %vm783, %v1671, 0
      %v1721 = vsel %vm783, %v1673, 0
      %1723 = vmatprep.subr.mxu0 0.0
      %1724 = vmatpush1.msra.mxu0 %v1222
      %1725 = vmatprep.subr.mxu0 0.0
      %1726 = vmatpush1.msra.mxu0 %v1223
      %1727 = vmatprep.subr.mxu0 0.0
      %1728 = vmatpush1.msra.mxu0 %v1224
      %1729 = vmatprep.subr.mxu0 0.0
      %1730 = vmatpush1.msra.mxu0 %v1225
      %1731 = vmatprep.subr.mxu0 0.0
      %1732 = vmatpush1.msra.mxu0 %v1226
      %1733 = vmatprep.subr.mxu0 0.0
      %1734 = vmatpush1.msra.mxu0 %v1227
      %1735 = vmatprep.subr.mxu0 0.0
      %1736 = vmatpush1.msra.mxu0 %v1228
      %1737 = vmatprep.subr.mxu0 0.0
      %1738 = vmatpush1.msra.mxu0 %v1229
      %1739 = vmatprep.subr.mxu0 0.0
      %1740 = vmatpush1.msra.mxu0 %v1230
      %1741 = vmatprep.subr.mxu0 0.0
      %1742 = vmatpush1.msra.mxu0 %v1231
      %1743 = vmatprep.subr.mxu0 0.0
      %1744 = vmatpush1.msra.mxu0 %v1232
      %1745 = vmatprep.subr.mxu0 0.0
      %1746 = vmatpush1.msra.mxu0 %v1233
      %1747 = vmatprep.subr.mxu0 0.0
      %1748 = vmatpush1.msra.mxu0 %v1234
      %1749 = vmatprep.subr.mxu0 0.0
      %1750 = vmatpush1.msra.mxu0 %v1235
      %1751 = vmatprep.subr.mxu0 0.0
      %1752 = vmatpush1.msra.mxu0 %v1236
      %1753 = vmatprep.subr.mxu0 0.0
      %1754 = vmatpush1.msra.mxu0 %v1237
      %1755 = vmatprep.subr.mxu0 0.0
      %1756 = vmatpush1.msra.mxu0 %v1238
      %1757 = vmatprep.subr.mxu0 0.0
      %1758 = vmatpush1.msra.mxu0 %v1239
      %1759 = vmatprep.subr.mxu0 0.0
      %1760 = vmatpush1.msra.mxu0 0.0
      %1761 = vmatprep.subr.mxu0 0.0
      %1762 = vmatpush1.msra.mxu0 0.0
      %1763 = vmatprep.subr.mxu0 0.0
      %1764 = vmatpush1.msra.mxu0 0.0
      %1765 = vmatprep.subr.mxu0 0.0
      %1766 = vmatpush1.msra.mxu0 0.0
      %1767 = vmatprep.subr.mxu0 0.0
      %1768 = vmatpush1.msra.mxu0 0.0
      %1769 = vmatprep.subr.mxu0 0.0
      %1770 = vmatpush1.msra.mxu0 0.0
      %1771 = vmatprep.subr.mxu0 0.0
      %1772 = vmatpush1.msra.mxu0 0.0
      %1773 = vmatprep.subr.mxu0 0.0
      %1774 = vmatpush1.msra.mxu0 0.0
      %1775 = vmatprep.subr.mxu0 0.0
      %1776 = vmatpush1.msra.mxu0 0.0
      %1777 = vmatprep.subr.mxu0 0.0
      %1778 = vmatpush1.msra.mxu0 0.0
      %1779 = vmatprep.subr.mxu0 0.0
      %1780 = vmatpush1.msra.mxu0 0.0
      %1781 = vmatprep.subr.mxu0 0.0
      %1782 = vmatpush1.msra.mxu0 0.0
      %1783 = vmatprep.subr.mxu0 0.0
      %1784 = vmatpush1.msra.mxu0 0.0
      %1785 = vmatprep.subr.mxu0 0.0
      %1786 = vmatpush1.msra.mxu0 0.0
      %1787 = vmatprep.mubr.f32.mxu0 %v1707
      %1788 = vmatmul.mubr.f32.gmra.mrb[0].mxu0 %v1692
      %v1789 = vpop.f32.mrb[0].mxu0
      %v1790 = vadd.f32 %v1705, %v1789
      %v1791 = vpop.f32.mrb[0].mxu0
      %1792 = vmatprep.mubr.f32.mxu0 %v1709
      %1793 = vmatmul.mubr.f32.gmra.mrb[0].mxu0 %v1693
      %v1794 = vpop.f32.mrb[0].mxu0
      %v1795 = vadd.f32 %v1705, %v1794
      %v1796 = vpop.f32.mrb[0].mxu0
      %1797 = vmatprep.mubr.f32.mxu0 %v1711
      %1798 = vmatmul.mubr.f32.gmra.mrb[0].mxu0 %v1694
      %v1799 = vpop.f32.mrb[0].mxu0
      %v1800 = vadd.f32 %v1705, %v1799
      %v1801 = vpop.f32.mrb[0].mxu0
      %1802 = vmatprep.mubr.f32.mxu0 %v1713
      %1803 = vmatmul.mubr.f32.gmra.mrb[0].mxu0 %v1695
      %v1804 = vpop.f32.mrb[0].mxu0
      %v1805 = vadd.f32 %v1705, %v1804
      %v1806 = vpop.f32.mrb[0].mxu0
      %1807 = vmatprep.mubr.f32.mxu0 %v1715
      %1808 = vmatmul.mubr.f32.gmra.mrb[0].mxu0 %v1696
      %v1809 = vpop.f32.mrb[0].mxu0
      %v1810 = vadd.f32 %v1705, %v1809
      %v1811 = vpop.f32.mrb[0].mxu0
      %1812 = vmatprep.mubr.f32.mxu0 %v1717
      %1813 = vmatmul.mubr.f32.gmra.mrb[0].mxu0 %v1697
      %v1814 = vpop.f32.mrb[0].mxu0
      %v1815 = vadd.f32 %v1705, %v1814
      %v1816 = vpop.f32.mrb[0].mxu0
      %1817 = vmatprep.mubr.f32.mxu0 %v1719
      %1818 = vmatmul.mubr.f32.gmra.mrb[0].mxu0 %v1698
      %v1819 = vpop.f32.mrb[0].mxu0
      %v1820 = vadd.f32 %v1705, %v1819
      %v1821 = vpop.f32.mrb[0].mxu0
      %1822 = vmatprep.mubr.f32.mxu0 %v1721
      %1823 = vmatmul.mubr.f32.gmra.mrb[0].mxu0 %v1699
      %v1824 = vpop.f32.mrb[0].mxu0
      %v1825 = vadd.f32 %v1705, %v1824
      %v1826 = vpop.f32.mrb[0].mxu0
      %1827 = vdwg.mxu0
      %v1828 = vlaneseq
      %v1829 = vshrl.u32 %v1828, 7
      %v1830 = vsub.s32 0, %v1829
      %v1831 = vrot.slane %v771, %v1830
      %v1832 = vadd.f32 %v1790, %v1831
      %v1833 = vadd.f32 %v1795, %v1831
      %v1834 = vadd.f32 %v1800, %v1831
      %v1835 = vadd.f32 %v1805, %v1831
      %v1836 = vadd.f32 %v1810, %v1831
      %v1837 = vadd.f32 %v1815, %v1831
      %v1838 = vadd.f32 %v1820, %v1831
      %v1839 = vadd.f32 %v1825, %v1831
      %v1840 = vld [vmem:[%s11] sm:$0x1]
      %v1841 = vld [vmem:[%s12] sm:$0x1]
      %v1842 = vld [vmem:[%s13] sm:$0xff]
      %v1843 = vld [vmem:[%s13 + $0x8] sm:$0xff]
      %v1844 = vld [vmem:[%s13 + $0x10] sm:$0xff]
      %v1845 = vld [vmem:[%s13 + $0x18] sm:$0xff]
      %v1846 = vsel %vm1590, %v1832, 0.0
      %v1847 = vsel %vm1590, %v1833, 0.0
      %v1848 = vadd.f32 %v1846, %v1847
      %v1849 = vsel %vm1590, %v1834, 0.0
      %v1850 = vadd.f32 %v1848, %v1849
      %v1851 = vsel %vm1590, %v1835, 0.0
      %v1852 = vadd.f32 %v1850, %v1851
      %v1853 = vsel %vm1590, %v1836, 0.0
      %v1854 = vadd.f32 %v1852, %v1853
      %v1855 = vsel %vm1590, %v1837, 0.0
      %v1856 = vadd.f32 %v1854, %v1855
      %v1857 = vsel %vm1590, %v1838, 0.0
      %v1858 = vadd.f32 %v1856, %v1857
      %v1859 = vsel %vm1590, %v1839, 0.0
      %v1860 = vadd.f32 %v1858, %v1859
      %v1861 = vrot.slane %v1860, 4
      %v1862 = vadd.f32 %v1860, %v1861
      %v1863 = vrot.slane %v1862, 2
      %v1864 = vadd.f32 %v1862, %v1863
      %v1865 = vrot.slane %v1864, 1
      %v1866 = vadd.f32 %v1864, %v1865
      %v1868 = vsel %vm1590, %v1866, 0
      %1870 = vmatprep.subr.mxu0 0.0
      %1871 = vmatpush1.msra.mxu0 %v1842
      %1872 = vmatprep.subr.mxu0 0.0
      %1873 = vmatpush1.msra.mxu0 %v1843
      %1874 = vmatprep.subr.mxu0 0.0
      %1875 = vmatpush1.msra.mxu0 %v1844
      %1876 = vmatprep.subr.mxu0 0.0
      %1877 = vmatpush1.msra.mxu0 %v1845
      %1878 = vmatprep.subr.mxu0 0.0
      %1879 = vmatpush1.msra.mxu0 0.0
      %1880 = vmatprep.subr.mxu0 0.0
      %1881 = vmatpush1.msra.mxu0 0.0
      %1882 = vmatprep.subr.mxu0 0.0
      %1883 = vmatpush1.msra.mxu0 0.0
      %1884 = vmatprep.subr.mxu0 0.0
      %1885 = vmatpush1.msra.mxu0 0.0
      %1886 = vmatprep.subr.mxu0 0.0
      %1887 = vmatpush1.msra.mxu0 0.0
      %1888 = vmatprep.subr.mxu0 0.0
      %1889 = vmatpush1.msra.mxu0 0.0
      %1890 = vmatprep.subr.mxu0 0.0
      %1891 = vmatpush1.msra.mxu0 0.0
      %1892 = vmatprep.subr.mxu0 0.0
      %1893 = vmatpush1.msra.mxu0 0.0
      %1894 = vmatprep.subr.mxu0 0.0
      %1895 = vmatpush1.msra.mxu0 0.0
      %1896 = vmatprep.subr.mxu0 0.0
      %1897 = vmatpush1.msra.mxu0 0.0
      %1898 = vmatprep.subr.mxu0 0.0
      %1899 = vmatpush1.msra.mxu0 0.0
      %1900 = vmatprep.subr.mxu0 0.0
      %1901 = vmatpush1.msra.mxu0 0.0
      %1902 = vmatprep.subr.mxu0 0.0
      %1903 = vmatpush1.msra.mxu0 0.0
      %1904 = vmatprep.subr.mxu0 0.0
      %1905 = vmatpush1.msra.mxu0 0.0
      %1906 = vmatprep.subr.mxu0 0.0
      %1907 = vmatpush1.msra.mxu0 0.0
      %1908 = vmatprep.subr.mxu0 0.0
      %1909 = vmatpush1.msra.mxu0 0.0
      %1910 = vmatprep.subr.mxu0 0.0
      %1911 = vmatpush1.msra.mxu0 0.0
      %1912 = vmatprep.subr.mxu0 0.0
      %1913 = vmatpush1.msra.mxu0 0.0
      %1914 = vmatprep.subr.mxu0 0.0
      %1915 = vmatpush1.msra.mxu0 0.0
      %1916 = vmatprep.subr.mxu0 0.0
      %1917 = vmatpush1.msra.mxu0 0.0
      %1918 = vmatprep.subr.mxu0 0.0
      %1919 = vmatpush1.msra.mxu0 0.0
      %1920 = vmatprep.subr.mxu0 0.0
      %1921 = vmatpush1.msra.mxu0 0.0
      %1922 = vmatprep.subr.mxu0 0.0
      %1923 = vmatpush1.msra.mxu0 0.0
      %1924 = vmatprep.subr.mxu0 0.0
      %1925 = vmatpush1.msra.mxu0 0.0
      %1926 = vmatprep.subr.mxu0 0.0
      %1927 = vmatpush1.msra.mxu0 0.0
      %1928 = vmatprep.subr.mxu0 0.0
      %1929 = vmatpush1.msra.mxu0 0.0
      %1930 = vmatprep.subr.mxu0 0.0
      %1931 = vmatpush1.msra.mxu0 0.0
      %1932 = vmatprep.subr.mxu0 0.0
      %1933 = vmatpush1.msra.mxu0 0.0
      %1934 = vmatprep.mubr.f32.mxu0 0.0
      %1935 = vmatmul.mubr.f32.gmra.mrb[0].mxu0 %v1868
      %v1936 = vpop.f32.mrb[0].mxu0
      %v1937 = vadd.f32 0.0, %v1936
      %v1938 = vpop.f32.mrb[0].mxu0
      %1939 = vdwg.mxu0
      %v1940 = vlaneseq
      %v1941 = vshrl.u32 %v1940, 7
      %v1942 = vsub.s32 0, %v1941
      %v1943 = vrot.slane %v1937, %v1942
      %v1944 = vsub.f32 %v1832, %v1943
      %v1945 = vsub.f32 %v1833, %v1943
      %v1946 = vsub.f32 %v1834, %v1943
      %v1947 = vsub.f32 %v1835, %v1943
      %v1948 = vsub.f32 %v1836, %v1943
      %v1949 = vsub.f32 %v1837, %v1943
      %v1950 = vsub.f32 %v1838, %v1943
      %v1951 = vsub.f32 %v1839, %v1943
      %v1952 = vmul.f32 %v1944, %v1944
      %v1953 = vmul.f32 %v1945, %v1945
      %v1954 = vmul.f32 %v1946, %v1946
      %v1955 = vmul.f32 %v1947, %v1947
      %v1956 = vmul.f32 %v1948, %v1948
      %v1957 = vmul.f32 %v1949, %v1949
      %v1958 = vmul.f32 %v1950, %v1950
      %v1959 = vmul.f32 %v1951, %v1951
      %v1960 = vsel %vm1590, %v1952, 0.0
      %v1961 = vsel %vm1590, %v1953, 0.0
      %v1962 = vadd.f32 %v1960, %v1961
      %v1963 = vsel %vm1590, %v1954, 0.0
      %v1964 = vadd.f32 %v1962, %v1963
      %v1965 = vsel %vm1590, %v1955, 0.0
      %v1966 = vadd.f32 %v1964, %v1965
      %v1967 = vsel %vm1590, %v1956, 0.0
      %v1968 = vadd.f32 %v1966, %v1967
      %v1969 = vsel %vm1590, %v1957, 0.0
      %v1970 = vadd.f32 %v1968, %v1969
      %v1971 = vsel %vm1590, %v1958, 0.0
      %v1972 = vadd.f32 %v1970, %v1971
      %v1973 = vsel %vm1590, %v1959, 0.0
      %v1974 = vadd.f32 %v1972, %v1973
      %v1975 = vrot.slane %v1974, 4
      %v1976 = vadd.f32 %v1974, %v1975
      %v1977 = vrot.slane %v1976, 2
      %v1978 = vadd.f32 %v1976, %v1977
      %v1979 = vrot.slane %v1978, 1
      %v1980 = vadd.f32 %v1978, %v1979
      %v1982 = vsel %vm1590, %v1980, 0
      %1984 = vmatprep.subr.mxu0 0.0
      %1985 = vmatpush1.msra.mxu0 %v1842
      %1986 = vmatprep.subr.mxu0 0.0
      %1987 = vmatpush1.msra.mxu0 %v1843
      %1988 = vmatprep.subr.mxu0 0.0
      %1989 = vmatpush1.msra.mxu0 %v1844
      %1990 = vmatprep.subr.mxu0 0.0
      %1991 = vmatpush1.msra.mxu0 %v1845
      %1992 = vmatprep.subr.mxu0 0.0
      %1993 = vmatpush1.msra.mxu0 0.0
      %1994 = vmatprep.subr.mxu0 0.0
      %1995 = vmatpush1.msra.mxu0 0.0
      %1996 = vmatprep.subr.mxu0 0.0
      %1997 = vmatpush1.msra.mxu0 0.0
      %1998 = vmatprep.subr.mxu0 0.0
      %1999 = vmatpush1.msra.mxu0 0.0
      %2000 = vmatprep.subr.mxu0 0.0
      %2001 = vmatpush1.msra.mxu0 0.0
      %2002 = vmatprep.subr.mxu0 0.0
      %2003 = vmatpush1.msra.mxu0 0.0
      %2004 = vmatprep.subr.mxu0 0.0
      %2005 = vmatpush1.msra.mxu0 0.0
      %2006 = vmatprep.subr.mxu0 0.0
      %2007 = vmatpush1.msra.mxu0 0.0
      %2008 = vmatprep.subr.mxu0 0.0
      %2009 = vmatpush1.msra.mxu0 0.0
      %2010 = vmatprep.subr.mxu0 0.0
      %2011 = vmatpush1.msra.mxu0 0.0
      %2012 = vmatprep.subr.mxu0 0.0
      %2013 = vmatpush1.msra.mxu0 0.0
      %2014 = vmatprep.subr.mxu0 0.0
      %2015 = vmatpush1.msra.mxu0 0.0
      %2016 = vmatprep.subr.mxu0 0.0
      %2017 = vmatpush1.msra.mxu0 0.0
      %2018 = vmatprep.subr.mxu0 0.0
      %2019 = vmatpush1.msra.mxu0 0.0
      %2020 = vmatprep.subr.mxu0 0.0
      %2021 = vmatpush1.msra.mxu0 0.0
      %2022 = vmatprep.subr.mxu0 0.0
      %2023 = vmatpush1.msra.mxu0 0.0
      %2024 = vmatprep.subr.mxu0 0.0
      %2025 = vmatpush1.msra.mxu0 0.0
      %2026 = vmatprep.subr.mxu0 0.0
      %2027 = vmatpush1.msra.mxu0 0.0
      %2028 = vmatprep.subr.mxu0 0.0
      %2029 = vmatpush1.msra.mxu0 0.0
      %2030 = vmatprep.subr.mxu0 0.0
      %2031 = vmatpush1.msra.mxu0 0.0
      %2032 = vmatprep.subr.mxu0 0.0
      %2033 = vmatpush1.msra.mxu0 0.0
      %2034 = vmatprep.subr.mxu0 0.0
      %2035 = vmatpush1.msra.mxu0 0.0
      %2036 = vmatprep.subr.mxu0 0.0
      %2037 = vmatpush1.msra.mxu0 0.0
      %2038 = vmatprep.subr.mxu0 0.0
      %2039 = vmatpush1.msra.mxu0 0.0
      %2040 = vmatprep.subr.mxu0 0.0
      %2041 = vmatpush1.msra.mxu0 0.0
      %2042 = vmatprep.subr.mxu0 0.0
      %2043 = vmatpush1.msra.mxu0 0.0
      %2044 = vmatprep.subr.mxu0 0.0
      %2045 = vmatpush1.msra.mxu0 0.0
      %2046 = vmatprep.subr.mxu0 0.0
      %2047 = vmatpush1.msra.mxu0 0.0
      %2048 = vmatprep.mubr.f32.mxu0 0.0
      %2049 = vmatmul.mubr.f32.gmra.mrb[0].mxu0 %v1982
      %v2050 = vpop.f32.mrb[0].mxu0
      %v2051 = vadd.f32 1e-05, %v2050
      %v2052 = vpop.f32.mrb[0].mxu0
      %2053 = vdwg.mxu0
      %v2054 = vrsqrt.pop %v2051
      %v2055 = vlaneseq
      %v2056 = vshrl.u32 %v2055, 7
      %v2057 = vsub.s32 0, %v2056
      %v2058 = vrot.slane %v2054, %v2057
      %v2059 = vmul.f32 %v1944, %v2058
      %v2060 = vmul.f32 %v1945, %v2058
      %v2061 = vmul.f32 %v1946, %v2058
      %v2062 = vmul.f32 %v1947, %v2058
      %v2063 = vmul.f32 %v1948, %v2058
      %v2064 = vmul.f32 %v1949, %v2058
      %v2065 = vmul.f32 %v1950, %v2058
      %v2066 = vmul.f32 %v1951, %v2058
      %v2068 = vlaneseq
      %v2069 = vshrl.u32 %v2068, 7
      %v2070 = vsub.s32 0, %v2069
      %v2071 = vrot.slane %v1840, %v2070
      %v2073 = vmul.f32 %v2059, %v2071
      %v2074 = vmul.f32 %v2060, %v2071
      %v2075 = vmul.f32 %v2061, %v2071
      %v2076 = vmul.f32 %v2062, %v2071
      %v2077 = vmul.f32 %v2063, %v2071
      %v2078 = vmul.f32 %v2064, %v2071
      %v2079 = vmul.f32 %v2065, %v2071
      %v2080 = vmul.f32 %v2066, %v2071
      %v2082 = vlaneseq
      %v2083 = vshrl.u32 %v2082, 7
      %v2084 = vsub.s32 0, %v2083
      %v2085 = vrot.slane %v1841, %v2084
      %v2087 = vadd.f32 %v2073, %v2085
      %v2088 = vadd.f32 %v2074, %v2085
      %v2089 = vadd.f32 %v2075, %v2085
      %v2090 = vadd.f32 %v2076, %v2085
      %v2091 = vadd.f32 %v2077, %v2085
      %v2092 = vadd.f32 %v2078, %v2085
      %v2093 = vadd.f32 %v2079, %v2085
      %v2094 = vadd.f32 %v2080, %v2085
      %v2095 = vxor.u32 %v2087, 2147483648
      %v2096 = vxor.u32 %v2088, 2147483648
      %v2097 = vxor.u32 %v2089, 2147483648
      %v2098 = vxor.u32 %v2090, 2147483648
      %v2099 = vxor.u32 %v2091, 2147483648
      %v2100 = vxor.u32 %v2092, 2147483648
      %v2101 = vxor.u32 %v2093, 2147483648
      %v2102 = vxor.u32 %v2094, 2147483648
      %v2103 = vmul.f32 %v2095, 1.442695
      %v2104 = vpow.pop %v2103
      %v2105 = vmul.f32 %v2096, 1.442695
      %v2106 = vpow.pop %v2105
      %v2107 = vmul.f32 %v2097, 1.442695
      %v2108 = vpow.pop %v2107
      %v2109 = vmul.f32 %v2098, 1.442695
      %v2110 = vpow.pop %v2109
      %v2111 = vmul.f32 %v2099, 1.442695
      %v2112 = vpow.pop %v2111
      %v2113 = vmul.f32 %v2100, 1.442695
      %v2114 = vpow.pop %v2113
      %v2115 = vmul.f32 %v2101, 1.442695
      %v2116 = vpow.pop %v2115
      %v2117 = vmul.f32 %v2102, 1.442695
      %v2118 = vpow.pop %v2117
      %v2119 = vadd.f32 %v2104, 1.0
      %v2120 = vadd.f32 %v2106, 1.0
      %v2121 = vadd.f32 %v2108, 1.0
      %v2122 = vadd.f32 %v2110, 1.0
      %v2123 = vadd.f32 %v2112, 1.0
      %v2124 = vadd.f32 %v2114, 1.0
      %v2125 = vadd.f32 %v2116, 1.0
      %v2126 = vadd.f32 %v2118, 1.0
      %v2127 = vrcp.pop %v2119
      %v2128 = vmul.f32 1.0, %v2127
      %v2129 = vrcp.pop %v2120
      %v2130 = vmul.f32 1.0, %v2129
      %v2131 = vrcp.pop %v2121
      %v2132 = vmul.f32 1.0, %v2131
      %v2133 = vrcp.pop %v2122
      %v2134 = vmul.f32 1.0, %v2133
      %v2135 = vrcp.pop %v2123
      %v2136 = vmul.f32 1.0, %v2135
      %v2137 = vrcp.pop %v2124
      %v2138 = vmul.f32 1.0, %v2137
      %v2139 = vrcp.pop %v2125
      %v2140 = vmul.f32 1.0, %v2139
      %v2141 = vrcp.pop %v2126
      %v2142 = vmul.f32 1.0, %v2141
      %v2143 = vmul.f32 %v2087, %v2128
      %v2144 = vmul.f32 %v2088, %v2130
      %v2145 = vmul.f32 %v2089, %v2132
      %v2146 = vmul.f32 %v2090, %v2134
      %v2147 = vmul.f32 %v2091, %v2136
      %v2148 = vmul.f32 %v2092, %v2138
      %v2149 = vmul.f32 %v2093, %v2140
      %v2150 = vmul.f32 %v2094, %v2142
      %v2151 = vld [vmem:[%s14] sm:$0xff]
      %v2152 = vld [vmem:[%s14 + $0x8] sm:$0xff]
      %v2153 = vld [vmem:[%s14 + $0x10] sm:$0xff]
      %v2154 = vld [vmem:[%s14 + $0x18] sm:$0xff]
      %v2155 = vld [vmem:[%s14 + $0x20] sm:$0xff]
      %v2156 = vld [vmem:[%s14 + $0x28] sm:$0xff]
      %v2157 = vld [vmem:[%s14 + $0x30] sm:$0xff]
      %v2158 = vld [vmem:[%s14 + $0x38] sm:$0xff]
      %v2159 = vld [vmem:[%s14 + $0x40] sm:$0xff]
      %v2160 = vld [vmem:[%s14 + $0x48] sm:$0xff]
      %v2161 = vld [vmem:[%s14 + $0x50] sm:$0xff]
      %v2162 = vld [vmem:[%s14 + $0x58] sm:$0xff]
      %v2163 = vld [vmem:[%s14 + $0x60] sm:$0xff]
      %v2164 = vld [vmem:[%s14 + $0x68] sm:$0xff]
      %v2165 = vld [vmem:[%s14 + $0x70] sm:$0xff]
      %v2166 = vld [vmem:[%s14 + $0x78] sm:$0xff]
      %v2167 = vld [vmem:[%s14 + $0x80] sm:$0xff]
      %v2168 = vld [vmem:[%s14 + $0x88] sm:$0xff]
      %v2169 = vld [vmem:[%s14 + $0x90] sm:$0xff]
      %v2170 = vld [vmem:[%s14 + $0x98] sm:$0xff]
      %v2171 = vld [vmem:[%s14 + $0xa0] sm:$0xff]
      %v2172 = vld [vmem:[%s14 + $0xa8] sm:$0xff]
      %v2173 = vld [vmem:[%s14 + $0xb0] sm:$0xff]
      %v2174 = vld [vmem:[%s14 + $0xb8] sm:$0xff]
      %v2175 = vld [vmem:[%s14 + $0xc0] sm:$0xff]
      %v2176 = vld [vmem:[%s14 + $0xc8] sm:$0xff]
      %v2177 = vld [vmem:[%s14 + $0xd0] sm:$0xff]
      %v2178 = vld [vmem:[%s14 + $0xd8] sm:$0xff]
      %v2179 = vld [vmem:[%s14 + $0xe0] sm:$0xff]
      %v2180 = vld [vmem:[%s14 + $0xe8] sm:$0xff]
      %v2181 = vld [vmem:[%s14 + $0xf0] sm:$0xff]
      %v2182 = vld [vmem:[%s14 + $0xf8] sm:$0xff]
      %v2183 = vld [vmem:[%s14 + $0x100] sm:$0xff]
      %v2184 = vld [vmem:[%s14 + $0x108] sm:$0xff]
      %v2185 = vld [vmem:[%s14 + $0x110] sm:$0xff]
      %v2186 = vld [vmem:[%s14 + $0x118] sm:$0xff]
      %v2187 = vmul.f32 %v2143, %v1404
      %v2188 = vmul.f32 %v2144, %v1406
      %v2189 = vmul.f32 %v2145, %v1408
      %v2190 = vmul.f32 %v2146, %v1410
      %v2191 = vmul.f32 %v2147, %v1412
      %v2192 = vmul.f32 %v2148, %v1414
      %v2193 = vmul.f32 %v2149, %v1416
      %v2194 = vmul.f32 %v2150, %v1415
      %v2195 = vmul.f32 %v2143, %v1444
      %v2196 = vmul.f32 %v2144, %v1446
      %v2197 = vmul.f32 %v2145, %v1448
      %v2198 = vmul.f32 %v2146, %v1450
      %v2199 = vmul.f32 %v2147, %v1452
      %v2200 = vmul.f32 %v2148, %v1454
      %v2201 = vmul.f32 %v2149, %v1456
      %v2202 = vmul.f32 %v2150, %v1458
      %v2211 = vrot.slane %v2143, 1
      %v2212 = vrot.slane %v2144, 1
      %v2213 = vsel %vm1401, %v2211, %v2212
      %v2214 = vrot.slane %v2145, 1
      %v2215 = vsel %vm1401, %v2212, %v2214
      %v2216 = vrot.slane %v2146, 1
      %v2217 = vsel %vm1401, %v2214, %v2216
      %v2218 = vrot.slane %v2147, 1
      %v2219 = vsel %vm1401, %v2216, %v2218
      %v2220 = vrot.slane %v2148, 1
      %v2221 = vsel %vm1401, %v2218, %v2220
      %v2222 = vrot.slane %v2149, 1
      %v2223 = vsel %vm1401, %v2220, %v2222
      %v2224 = vrot.slane %v2150, 1
      %v2225 = vsel %vm1401, %v2222, %v2224
      %2226 = vrot.lane.b32.xlu0 %v2211, 32
      %v2227 = vpop.permute.xlu0 %2226
      %2228 = vrot.lane.b32.xlu0 %v2213, 32
      %v2229 = vpop.permute.xlu0 %2228
      %2230 = vrot.lane.b32.xlu0 %v2215, 32
      %v2231 = vpop.permute.xlu0 %2230
      %2232 = vrot.lane.b32.xlu0 %v2217, 32
      %v2233 = vpop.permute.xlu0 %2232
      %2234 = vrot.lane.b32.xlu0 %v2219, 32
      %v2235 = vpop.permute.xlu0 %2234
      %2236 = vrot.lane.b32.xlu0 %v2221, 32
      %v2237 = vpop.permute.xlu0 %2236
      %2238 = vrot.lane.b32.xlu0 %v2223, 32
      %v2239 = vpop.permute.xlu0 %2238
      %2240 = vrot.lane.b32.xlu0 %v2225, 32
      %v2241 = vpop.permute.xlu0 %2240
      %2242 = vrot.lane.b32.xlu0 %v2224, 32
      %v2243 = vpop.permute.xlu0 %2242
      %v2261 = vrot.slane %v2195, 2
      %v2262 = vrot.slane %v2196, 2
      %v2263 = vsel %vm1536, %v2261, %v2262
      %v2264 = vrot.slane %v2197, 2
      %v2265 = vsel %vm1536, %v2262, %v2264
      %v2266 = vrot.slane %v2198, 2
      %v2267 = vsel %vm1536, %v2264, %v2266
      %v2268 = vrot.slane %v2199, 2
      %v2269 = vsel %vm1536, %v2266, %v2268
      %v2270 = vrot.slane %v2200, 2
      %v2271 = vsel %vm1536, %v2268, %v2270
      %v2272 = vrot.slane %v2201, 2
      %v2273 = vsel %vm1536, %v2270, %v2272
      %v2274 = vrot.slane %v2202, 2
      %v2275 = vsel %vm1536, %v2272, %v2274
      %v2276 = vsel %vm1536, %v2274, %v1552
      %2277 = vrot.lane.b32.xlu0 %v2261, 64
      %v2278 = vpop.permute.xlu0 %2277
      %2279 = vrot.lane.b32.xlu0 %v2263, 64
      %v2280 = vpop.permute.xlu0 %2279
      %2281 = vrot.lane.b32.xlu0 %v2265, 64
      %v2282 = vpop.permute.xlu0 %2281
      %2283 = vrot.lane.b32.xlu0 %v2267, 64
      %v2284 = vpop.permute.xlu0 %2283
      %2285 = vrot.lane.b32.xlu0 %v2269, 64
      %v2286 = vpop.permute.xlu0 %2285
      %2287 = vrot.lane.b32.xlu0 %v2271, 64
      %v2288 = vpop.permute.xlu0 %2287
      %2289 = vrot.lane.b32.xlu0 %v2273, 64
      %v2290 = vpop.permute.xlu0 %2289
      %2291 = vrot.lane.b32.xlu0 %v2275, 64
      %v2292 = vpop.permute.xlu0 %2291
      %2293 = vrot.lane.b32.xlu0 %v2276, 64
      %v2294 = vpop.permute.xlu0 %2293
      %v2304 = vsel %vm1590, %v1426, %v2227
      %v2305 = vsel %vm1590, %v2187, %v2229
      %v2306 = vsel %vm1590, %v2188, %v2231
      %v2307 = vsel %vm1590, %v2189, %v2233
      %v2308 = vsel %vm1590, %v2190, %v2235
      %v2309 = vsel %vm1590, %v2191, %v2237
      %v2310 = vsel %vm1590, %v2192, %v2239
      %v2311 = vsel %vm1590, %v2193, %v2241
      %v2312 = vsel %vm1590, %v2194, %v2243
      %vm2313 = vcmask 523264
      %v2314 = vsel %vm2313, %v2304, %v2278
      %v2315 = vsel %vm2313, %v2305, %v2280
      %v2316 = vsel %vm2313, %v2306, %v2282
      %v2317 = vsel %vm2313, %v2307, %v2284
      %v2318 = vsel %vm2313, %v2308, %v2286
      %v2319 = vsel %vm2313, %v2309, %v2288
      %v2320 = vsel %vm2313, %v2310, %v2290
      %v2321 = vsel %vm2313, %v2311, %v2292
      %v2322 = vsel %vm2313, %v2312, %v2294
      %v2332 = vrot.slane %v2314, 7
      %v2333 = vrot.slane %v2315, 7
      %v2334 = vsel %vm1443, %v2332, %v2333
      %v2335 = vrot.slane %v2316, 7
      %v2336 = vsel %vm1443, %v2333, %v2335
      %v2337 = vrot.slane %v2317, 7
      %v2338 = vsel %vm1443, %v2335, %v2337
      %v2339 = vrot.slane %v2318, 7
      %v2340 = vsel %vm1443, %v2337, %v2339
      %v2341 = vrot.slane %v2319, 7
      %v2342 = vsel %vm1443, %v2339, %v2341
      %v2343 = vrot.slane %v2320, 7
      %v2344 = vsel %vm1443, %v2341, %v2343
      %v2345 = vrot.slane %v2321, 7
      %v2346 = vsel %vm1443, %v2343, %v2345
      %v2347 = vrot.slane %v2322, 7
      %v2348 = vsel %vm1443, %v2345, %v2347
      %2356 = vrot.lane.b32.xlu0 %v2334, 96
      %v2357 = vpop.permute.xlu0 %2356
      %2358 = vrot.lane.b32.xlu0 %v2336, 96
      %v2359 = vpop.permute.xlu0 %2358
      %2360 = vrot.lane.b32.xlu0 %v2338, 96
      %v2361 = vpop.permute.xlu0 %2360
      %2362 = vrot.lane.b32.xlu0 %v2340, 96
      %v2363 = vpop.permute.xlu0 %2362
      %2364 = vrot.lane.b32.xlu0 %v2342, 96
      %v2365 = vpop.permute.xlu0 %2364
      %2366 = vrot.lane.b32.xlu0 %v2344, 96
      %v2367 = vpop.permute.xlu0 %2366
      %2368 = vrot.lane.b32.xlu0 %v2346, 96
      %v2369 = vpop.permute.xlu0 %2368
      %2370 = vrot.lane.b32.xlu0 %v2348, 96
      %v2371 = vpop.permute.xlu0 %2370
      %2380 = vrot.lane.b32.xlu0 %v2336, 64
      %v2381 = vpop.permute.xlu0 %2380
      %2382 = vrot.lane.b32.xlu0 %v2338, 64
      %v2383 = vpop.permute.xlu0 %2382
      %2384 = vrot.lane.b32.xlu0 %v2340, 64
      %v2385 = vpop.permute.xlu0 %2384
      %2386 = vrot.lane.b32.xlu0 %v2342, 64
      %v2387 = vpop.permute.xlu0 %2386
      %2388 = vrot.lane.b32.xlu0 %v2344, 64
      %v2389 = vpop.permute.xlu0 %2388
      %2390 = vrot.lane.b32.xlu0 %v2346, 64
      %v2391 = vpop.permute.xlu0 %2390
      %2392 = vrot.lane.b32.xlu0 %v2348, 64
      %v2393 = vpop.permute.xlu0 %2392
      %2394 = vrot.lane.b32.xlu0 0.0, 64
      %v2395 = vpop.permute.xlu0 %2394
      %v2404 = vsel %vm1691, 0.0, %v2357
      %v2405 = vsel %vm1691, %v2334, %v2359
      %v2406 = vsel %vm1691, %v2336, %v2361
      %v2407 = vsel %vm1691, %v2338, %v2363
      %v2408 = vsel %vm1691, %v2340, %v2365
      %v2409 = vsel %vm1691, %v2342, %v2367
      %v2410 = vsel %vm1691, %v2344, %v2369
      %v2411 = vsel %vm1691, %v2346, %v2371
      %v2412 = vsel %vm2313, %v2357, %v2381
      %v2413 = vsel %vm2313, %v2359, %v2383
      %v2414 = vsel %vm2313, %v2361, %v2385
      %v2415 = vsel %vm2313, %v2363, %v2387
      %v2416 = vsel %vm2313, %v2365, %v2389
      %v2417 = vsel %vm2313, %v2367, %v2391
      %v2418 = vsel %vm2313, %v2369, %v2393
      %v2419 = vsel %vm2313, %v2371, %v2395
      %v2420 = vld [vmem:[%s15] sm:$0x1]
      %v2422 = vlaneseq
      %v2423 = vshrl.u32 %v2422, 7
      %v2424 = vsub.s32 0, %v2423
      %v2425 = vrot.slane %v2420, %v2424
      %v2427 = vsel %vm1590, %v2381, 0
      %v2429 = vsel %vm1590, %v2383, 0
      %v2431 = vsel %vm1590, %v2385, 0
      %v2433 = vsel %vm1590, %v2387, 0
      %v2435 = vsel %vm1590, %v2389, 0
      %v2437 = vsel %vm1590, %v2391, 0
      %v2439 = vsel %vm1590, %v2393, 0
      %v2441 = vsel %vm1590, %v2395, 0
      %2443 = vmatprep.subr.mxu0 0.0
      %2444 = vmatpush1.msra.mxu0 %v2151
      %2445 = vmatprep.subr.mxu0 0.0
      %2446 = vmatpush1.msra.mxu0 %v2152
      %2447 = vmatprep.subr.mxu0 0.0
      %2448 = vmatpush1.msra.mxu0 %v2153
      %2449 = vmatprep.subr.mxu0 0.0
      %2450 = vmatpush1.msra.mxu0 %v2154
      %2451 = vmatprep.subr.mxu0 0.0
      %2452 = vmatpush1.msra.mxu0 %v2155
      %2453 = vmatprep.subr.mxu0 0.0
      %2454 = vmatpush1.msra.mxu0 %v2156
      %2455 = vmatprep.subr.mxu0 0.0
      %2456 = vmatpush1.msra.mxu0 %v2157
      %2457 = vmatprep.subr.mxu0 0.0
      %2458 = vmatpush1.msra.mxu0 %v2158
      %2459 = vmatprep.subr.mxu0 0.0
      %2460 = vmatpush1.msra.mxu0 %v2159
      %2461 = vmatprep.subr.mxu0 0.0
      %2462 = vmatpush1.msra.mxu0 %v2160
      %2463 = vmatprep.subr.mxu0 0.0
      %2464 = vmatpush1.msra.mxu0 %v2161
      %2465 = vmatprep.subr.mxu0 0.0
      %2466 = vmatpush1.msra.mxu0 %v2162
      %2467 = vmatprep.subr.mxu0 0.0
      %2468 = vmatpush1.msra.mxu0 %v2163
      %2469 = vmatprep.subr.mxu0 0.0
      %2470 = vmatpush1.msra.mxu0 %v2164
      %2471 = vmatprep.subr.mxu0 0.0
      %2472 = vmatpush1.msra.mxu0 %v2165
      %2473 = vmatprep.subr.mxu0 0.0
      %2474 = vmatpush1.msra.mxu0 %v2166
      %2475 = vmatprep.subr.mxu0 0.0
      %2476 = vmatpush1.msra.mxu0 %v2167
      %2477 = vmatprep.subr.mxu0 0.0
      %2478 = vmatpush1.msra.mxu0 %v2168
      %2479 = vmatprep.subr.mxu0 0.0
      %2480 = vmatpush1.msra.mxu0 %v2169
      %2481 = vmatprep.subr.mxu0 0.0
      %2482 = vmatpush1.msra.mxu0 %v2170
      %2483 = vmatprep.subr.mxu0 0.0
      %2484 = vmatpush1.msra.mxu0 %v2171
      %2485 = vmatprep.subr.mxu0 0.0
      %2486 = vmatpush1.msra.mxu0 %v2172
      %2487 = vmatprep.subr.mxu0 0.0
      %2488 = vmatpush1.msra.mxu0 %v2173
      %2489 = vmatprep.subr.mxu0 0.0
      %2490 = vmatpush1.msra.mxu0 %v2174
      %2491 = vmatprep.subr.mxu0 0.0
      %2492 = vmatpush1.msra.mxu0 %v2175
      %2493 = vmatprep.subr.mxu0 0.0
      %2494 = vmatpush1.msra.mxu0 %v2176
      %2495 = vmatprep.subr.mxu0 0.0
      %2496 = vmatpush1.msra.mxu0 %v2177
      %2497 = vmatprep.subr.mxu0 0.0
      %2498 = vmatpush1.msra.mxu0 %v2178
      %2499 = vmatprep.subr.mxu0 0.0
      %2500 = vmatpush1.msra.mxu0 %v2179
      %2501 = vmatprep.subr.mxu0 0.0
      %2502 = vmatpush1.msra.mxu0 %v2180
      %2503 = vmatprep.subr.mxu0 0.0
      %2504 = vmatpush1.msra.mxu0 %v2181
      %2505 = vmatprep.subr.mxu0 0.0
      %2506 = vmatpush1.msra.mxu0 %v2182
      %2507 = vmatprep.mubr.f32.mxu0 %v2412
      %2508 = vmatmul.mubr.f32.gmra.mrb[0].mxu0 %v2404
      %v2509 = vpop.f32.mrb[0].mxu0
      %v2510 = vadd.f32 %v2425, %v2509
      %v2511 = vpop.f32.mrb[0].mxu0
      %2512 = vmatprep.mubr.f32.mxu0 %v2413
      %2513 = vmatmul.mubr.f32.gmra.mrb[0].mxu0 %v2405
      %v2514 = vpop.f32.mrb[0].mxu0
      %v2515 = vadd.f32 %v2425, %v2514
      %v2516 = vpop.f32.mrb[0].mxu0
      %2517 = vmatprep.mubr.f32.mxu0 %v2414
      %2518 = vmatmul.mubr.f32.gmra.mrb[0].mxu0 %v2406
      %v2519 = vpop.f32.mrb[0].mxu0
      %v2520 = vadd.f32 %v2425, %v2519
      %v2521 = vpop.f32.mrb[0].mxu0
      %2522 = vmatprep.mubr.f32.mxu0 %v2415
      %2523 = vmatmul.mubr.f32.gmra.mrb[0].mxu0 %v2407
      %v2524 = vpop.f32.mrb[0].mxu0
      %v2525 = vadd.f32 %v2425, %v2524
      %v2526 = vpop.f32.mrb[0].mxu0
      %2527 = vmatprep.mubr.f32.mxu0 %v2416
      %2528 = vmatmul.mubr.f32.gmra.mrb[0].mxu0 %v2408
      %v2529 = vpop.f32.mrb[0].mxu0
      %v2530 = vadd.f32 %v2425, %v2529
      %v2531 = vpop.f32.mrb[0].mxu0
      %2532 = vmatprep.mubr.f32.mxu0 %v2417
      %2533 = vmatmul.mubr.f32.gmra.mrb[0].mxu0 %v2409
      %v2534 = vpop.f32.mrb[0].mxu0
      %v2535 = vadd.f32 %v2425, %v2534
      %v2536 = vpop.f32.mrb[0].mxu0
      %2537 = vmatprep.mubr.f32.mxu0 %v2418
      %2538 = vmatmul.mubr.f32.gmra.mrb[0].mxu0 %v2410
      %v2539 = vpop.f32.mrb[0].mxu0
      %v2540 = vadd.f32 %v2425, %v2539
      %v2541 = vpop.f32.mrb[0].mxu0
      %2542 = vmatprep.mubr.f32.mxu0 %v2419
      %2543 = vmatmul.mubr.f32.gmra.mrb[0].mxu0 %v2411
      %v2544 = vpop.f32.mrb[0].mxu0
      %v2545 = vadd.f32 %v2425, %v2544
      %v2546 = vpop.f32.mrb[0].mxu0
      %2547 = vdwg.mxu0
      %2548 = vmatprep.subr.mxu0 0.0
      %2549 = vmatpush1.msra.mxu0 %v2183
      %2550 = vmatprep.subr.mxu0 0.0
      %2551 = vmatpush1.msra.mxu0 %v2184
      %2552 = vmatprep.subr.mxu0 0.0
      %2553 = vmatpush1.msra.mxu0 %v2185
      %2554 = vmatprep.subr.mxu0 0.0
      %2555 = vmatpush1.msra.mxu0 %v2186
      %2556 = vmatprep.subr.mxu0 0.0
      %2557 = vmatpush1.msra.mxu0 0.0
      %2558 = vmatprep.subr.mxu0 0.0
      %2559 = vmatpush1.msra.mxu0 0.0
      %2560 = vmatprep.subr.mxu0 0.0
      %2561 = vmatpush1.msra.mxu0 0.0
      %2562 = vmatprep.subr.mxu0 0.0
      %2563 = vmatpush1.msra.mxu0 0.0
      %2564 = vmatprep.subr.mxu0 0.0
      %2565 = vmatpush1.msra.mxu0 0.0
      %2566 = vmatprep.subr.mxu0 0.0
      %2567 = vmatpush1.msra.mxu0 0.0
      %2568 = vmatprep.subr.mxu0 0.0
      %2569 = vmatpush1.msra.mxu0 0.0
      %2570 = vmatprep.subr.mxu0 0.0
      %2571 = vmatpush1.msra.mxu0 0.0
      %2572 = vmatprep.subr.mxu0 0.0
      %2573 = vmatpush1.msra.mxu0 0.0
      %2574 = vmatprep.subr.mxu0 0.0
      %2575 = vmatpush1.msra.mxu0 0.0
      %2576 = vmatprep.subr.mxu0 0.0
      %2577 = vmatpush1.msra.mxu0 0.0
      %2578 = vmatprep.subr.mxu0 0.0
      %2579 = vmatpush1.msra.mxu0 0.0
      %2580 = vmatprep.subr.mxu0 0.0
      %2581 = vmatpush1.msra.mxu0 0.0
      %2582 = vmatprep.subr.mxu0 0.0
      %2583 = vmatpush1.msra.mxu0 0.0
      %2584 = vmatprep.subr.mxu0 0.0
      %2585 = vmatpush1.msra.mxu0 0.0
      %2586 = vmatprep.subr.mxu0 0.0
      %2587 = vmatpush1.msra.mxu0 0.0
      %2588 = vmatprep.subr.mxu0 0.0
      %2589 = vmatpush1.msra.mxu0 0.0
      %2590 = vmatprep.subr.mxu0 0.0
      %2591 = vmatpush1.msra.mxu0 0.0
      %2592 = vmatprep.subr.mxu0 0.0
      %2593 = vmatpush1.msra.mxu0 0.0
      %2594 = vmatprep.subr.mxu0 0.0
      %2595 = vmatpush1.msra.mxu0 0.0
      %2596 = vmatprep.subr.mxu0 0.0
      %2597 = vmatpush1.msra.mxu0 0.0
      %2598 = vmatprep.subr.mxu0 0.0
      %2599 = vmatpush1.msra.mxu0 0.0
      %2600 = vmatprep.subr.mxu0 0.0
      %2601 = vmatpush1.msra.mxu0 0.0
      %2602 = vmatprep.subr.mxu0 0.0
      %2603 = vmatpush1.msra.mxu0 0.0
      %2604 = vmatprep.subr.mxu0 0.0
      %2605 = vmatpush1.msra.mxu0 0.0
      %2606 = vmatprep.subr.mxu0 0.0
      %2607 = vmatpush1.msra.mxu0 0.0
      %2608 = vmatprep.subr.mxu0 0.0
      %2609 = vmatpush1.msra.mxu0 0.0
      %2610 = vmatprep.subr.mxu0 0.0
      %2611 = vmatpush1.msra.mxu0 0.0
      %2612 = vmatprep.mubr.f32.mxu0 0.0
      %2613 = vmatmul.mubr.f32.gmra.mrb[0].mxu0 %v2427
      %v2614 = vpop.f32.mrb[0].mxu0
      %v2615 = vadd.f32 %v2510, %v2614
      %v2616 = vpop.f32.mrb[0].mxu0
      %2617 = vmatprep.mubr.f32.mxu0 0.0
      %2618 = vmatmul.mubr.f32.gmra.mrb[0].mxu0 %v2429
      %v2619 = vpop.f32.mrb[0].mxu0
      %v2620 = vadd.f32 %v2515, %v2619
      %v2621 = vpop.f32.mrb[0].mxu0
      %2622 = vmatprep.mubr.f32.mxu0 0.0
      %2623 = vmatmul.mubr.f32.gmra.mrb[0].mxu0 %v2431
      %v2624 = vpop.f32.mrb[0].mxu0
      %v2625 = vadd.f32 %v2520, %v2624
      %v2626 = vpop.f32.mrb[0].mxu0
      %2627 = vmatprep.mubr.f32.mxu0 0.0
      %2628 = vmatmul.mubr.f32.gmra.mrb[0].mxu0 %v2433
      %v2629 = vpop.f32.mrb[0].mxu0
      %v2630 = vadd.f32 %v2525, %v2629
      %v2631 = vpop.f32.mrb[0].mxu0
      %2632 = vmatprep.mubr.f32.mxu0 0.0
      %2633 = vmatmul.mubr.f32.gmra.mrb[0].mxu0 %v2435
      %v2634 = vpop.f32.mrb[0].mxu0
      %v2635 = vadd.f32 %v2530, %v2634
      %v2636 = vpop.f32.mrb[0].mxu0
      %2637 = vmatprep.mubr.f32.mxu0 0.0
      %2638 = vmatmul.mubr.f32.gmra.mrb[0].mxu0 %v2437
      %v2639 = vpop.f32.mrb[0].mxu0
      %v2640 = vadd.f32 %v2535, %v2639
      %v2641 = vpop.f32.mrb[0].mxu0
      %2642 = vmatprep.mubr.f32.mxu0 0.0
      %2643 = vmatmul.mubr.f32.gmra.mrb[0].mxu0 %v2439
      %v2644 = vpop.f32.mrb[0].mxu0
      %v2645 = vadd.f32 %v2540, %v2644
      %v2646 = vpop.f32.mrb[0].mxu0
      %2647 = vmatprep.mubr.f32.mxu0 0.0
      %2648 = vmatmul.mubr.f32.gmra.mrb[0].mxu0 %v2441
      %v2649 = vpop.f32.mrb[0].mxu0
      %v2650 = vadd.f32 %v2545, %v2649
      %v2651 = vpop.f32.mrb[0].mxu0
      %2652 = vdwg.mxu0
      %v2653 = vadd.f32 %v2615, %v875
      %v2654 = vadd.f32 %v2620, %v880
      %v2655 = vadd.f32 %v2625, %v885
      %v2656 = vadd.f32 %v2630, %v890
      %v2657 = vadd.f32 %v2635, %v895
      %v2658 = vadd.f32 %v2640, %v900
      %v2659 = vadd.f32 %v2645, %v905
      %v2660 = vadd.f32 %v2650, %v910
      %2661 = vst.msk [vmem:[%s538] sm:$0xff] %vm1590, %v2653
      %2662 = vst.msk [vmem:[%s538 + $0x8] sm:$0xff] %vm1590, %v2654
      %2663 = vst.msk [vmem:[%s538 + $0x10] sm:$0xff] %vm1590, %v2655
      %2664 = vst.msk [vmem:[%s538 + $0x18] sm:$0xff] %vm1590, %v2656
      %2665 = vst.msk [vmem:[%s538 + $0x20] sm:$0xff] %vm1590, %v2657
      %2666 = vst.msk [vmem:[%s538 + $0x28] sm:$0xff] %vm1590, %v2658
      %2667 = vst.msk [vmem:[%s538 + $0x30] sm:$0xff] %vm1590, %v2659
      %2668 = vst.msk [vmem:[%s538 + $0x38] sm:$0xff] %vm1590, %v2660
      %p2669 = scmp.lt.s32.totalorder %s27, 1
      %s2670 = scalar_select %p2669, %s27, 1
      %s2671 = smul.addr %s2670, 8
      %s2672 = smul.addr %s2671, 8
      %s2673 = scalar_lea.vmem %s16, %s2672
      // Predicated region
      $region85: #{tpu_custom_call.1} parent=83 // pred_check
        %p2674 = pneg %p391
      $region86: #{tpu_custom_call.1} parent=83 // pred_check_branch
        %2676 = sbr.rel (%p2674) target = $region88
      $region87: #{tpu_custom_call.1} parent=83 // pred_region
        _
      $region88: #{tpu_custom_call.1} parent=83 // pred_fallthru
        _
    $region84: #{tpu_custom_call.1} parent=5 // pred_fallthru
      _
    %p2677 = scmp.le.s32.totalorder 2, %s22
    // Predicated region
    $region89: #{tpu_custom_call.1} parent=5 // pred_check
      %p2678 = pneg %p2677
    $region90: #{tpu_custom_call.1} parent=5 // pred_check_branch
      %2680 = sbr.rel (%p2678) target = $region92
    $region91: #{tpu_custom_call.1} parent=5 // pred_region
      %s2681 = ssub.s32 %s22, 2
      // Predicated region
      $region93: #{tpu_custom_call.1} parent=91 // pred_check
        %p2682 = pneg %p397
      $region94: #{tpu_custom_call.1} parent=91 // pred_check_branch
        %2684 = sbr.rel (%p2682) target = $region96
      $region95: #{tpu_custom_call.1} parent=91 // pred_region
        %p2685 = scmp.lt.s32.totalorder %s28, 1
        %s2686 = scalar_select %p2685, %s28, 1
        %s2687 = smul.addr %s2686, 8
        %s2688 = smul.addr %s2687, 8
        %s2689 = scalar_lea.vmem %s16, %s2688
      $region96: #{tpu_custom_call.1} parent=91 // pred_fallthru
        _
    $region92: #{tpu_custom_call.1} parent=5 // pred_fallthru
      _
  $region6: #{tpu_custom_call.1} parent=0 // loop_footer
    %s26 = sadd.s32 1, %s22
  $region7: #{tpu_custom_call.1} parent=0 // loop_footer_branch
    %21 = sbr.rel target = $region3
  $region8: #{tpu_custom_call.1} parent=0 // loop_exit
    _

</llo_original>
